<compile_context>
chip_gen: v7x
topology: tpu7x:2x2x1
jax: 0.10.0
libtpu: 0.0.40
codegen_flags: <defaults>
</compile_context>

<pallas_src>
import jax
import jax.numpy as jnp
from jax.experimental import pallas as pl
from jax.experimental.pallas import tpu as pltpu

# ----------------------------- model hyper-parameters (small, synthetic) ------------------
B = 2          # batch
S = 8          # sequence length
H = 32         # hidden size
NH = 2         # attention heads
HD = H // NH   # head dim
I = 64         # intermediate (FFN) size
NLAYERS = 2    # transformer layers
VOCAB = 64     # vocab size
PAD_ID = 1     # RoBERTa pad token id (mask = ids != 1)
MAX_POS = S + 2
EPS = 1e-5     # RoBERTa layer_norm_eps

# slab row layout (per layer), each row padded to 128 lanes
_ROW_BQKV, _ROW_BO, _ROW_LN1G, _ROW_LN1B, _ROW_BI, _ROW_BD, _ROW_LN2G, _ROW_LN2B = range(8)


# ----------------------------- in-kernel helpers ------------------------------------------
def _layernorm(x, g, b):
    mu = jnp.mean(x, axis=-1, keepdims=True)
    var = jnp.mean(jnp.square(x - mu), axis=-1, keepdims=True)
    return (x - mu) * jax.lax.rsqrt(var + EPS) * g + b


def _gelu(x):
    # TODO(synk): HF RoBERTa uses exact (erf) GELU; tanh approximation used for clean EUP lowering.
    return 0.5 * x * (1.0 + jnp.tanh(0.7978845608028654 * (x + 0.044715 * x * x * x)))


# ----------------------------- fused per-layer kernel (grid over layers) ------------------
def _encoder_layer_kernel(emb_ref, mbias_ref, embln_ref,
                          wqkv_ref, wo_ref, wi_ref, wd_ref, slab_ref,
                          wp_ref, bp_ref, o_ref, x_ref):
    """One RoBERTa encoder layer per grid step; emb-LN prologue at l==0, pooler at l==L-1.

    emb_ref   : (B*S, H)   f32   pre-LN embeddings (word + pos + type), rows = (b, s)
    mbias_ref : (B, 1, S)  f32   additive attention-mask bias (0 / -1e9)
    embln_ref : (2, H)     f32   embedding LayerNorm gamma / beta
    wqkv_ref  : (1, H, 3H) bf16  fused Q|K|V projection (this layer's block)
    wo_ref    : (1, H, H)  bf16  attention output projection
    wi_ref    : (1, H, I)  bf16  FFN in
    wd_ref    : (1, I, H)  bf16  FFN out
    slab_ref  : (1, 8, 128) f32  packed biases + LayerNorm params (lane-padded)
    wp_ref    : (H, H) bf16 / bp_ref (1, H) f32   pooler dense
    o_ref     : (B, H)     f32   pooled output (written once at the last layer)
    x_ref     : (B*S, H)   f32   persistent VMEM activation scratch
    """
    l = pl.program_id(0)
    scale = 1.0 / (HD ** 0.5)

    # Prologue: embedding LayerNorm into the persistent activation buffer.
    @pl.when(l == 0)
    def _():
        x_ref[...] = _layernorm(emb_ref[...], embln_ref[0:1, :], embln_ref[1:2, :])

    x = x_ref[...]                                          # (B*S, H) f32, VMEM-resident
    sm = slab_ref[0]                                        # (8, 128) small params
    # Hoist the mask broadcast out of the head loop (JAX does not CSE broadcast_in_dim).
    mb = jnp.broadcast_to(mbias_ref[...], (B, S, S))        # (B, S, S)

    # Fused QKV projection: bf16 MXU inputs, f32 accumulation, f32 bias add.
    qkv = jnp.dot(x.astype(jnp.bfloat16), wqkv_ref[0],
                  preferred_element_type=jnp.float32) + sm[_ROW_BQKV:_ROW_BQKV + 1, 0:3 * H]
    q = (qkv[:, 0:H] * scale).astype(jnp.bfloat16).reshape(B, S, H)   # fold 1/sqrt(HD) into q
    k = qkv[:, H:2 * H].astype(jnp.bfloat16).reshape(B, S, H)
    v = qkv[:, 2 * H:3 * H].astype(jnp.bfloat16).reshape(B, S, H)

    # Attention, batched over B; softmax stats stay f32.
    # TODO(synk): a single head-batched 'bqhd,bkhd->bhqk' einsum would halve MXU pushes, but
    # rank-4 / two-batch-dim dot_general does not lower reliably in Mosaic; keep a tiny static
    # unroll over NH=2 heads and merge contexts with one lane-concat + a single Wo matmul.
    ctx_heads = []
    for h in range(NH):
        lo, hi = h * HD, (h + 1) * HD
        s = jnp.einsum('bqd,bkd->bqk', q[:, :, lo:hi], k[:, :, lo:hi],
                       preferred_element_type=jnp.float32) + mb        # (B, S, S) f32
        s = s - jnp.max(s, axis=-1, keepdims=True)
        p = jnp.exp(s)
        p = p * pl.reciprocal(jnp.sum(p, axis=-1, keepdims=True), approx=True)
        ctx_heads.append(
            jnp.einsum('bqk,bkd->bqd', p.astype(jnp.bfloat16), v[:, :, lo:hi],
                       preferred_element_type=jnp.float32))            # (B, S, HD)
    ctx = jnp.concatenate(ctx_heads, axis=-1).reshape(B * S, H)
    attn = jnp.dot(ctx.astype(jnp.bfloat16), wo_ref[0],
                   preferred_element_type=jnp.float32) + sm[_ROW_BO:_ROW_BO + 1, 0:H]

    # Residual + LN, GELU FFN, residual + LN (all f32 on the VPU/EUP).
    y = _layernorm(x + attn, sm[_ROW_LN1G:_ROW_LN1G + 1, 0:H],
                   sm[_ROW_LN1B:_ROW_LN1B + 1, 0:H])
    hid = _gelu(jnp.dot(y.astype(jnp.bfloat16), wi_ref[0],
                        preferred_element_type=jnp.float32) + sm[_ROW_BI:_ROW_BI + 1, 0:I])
    ff = jnp.dot(hid.astype(jnp.bfloat16), wd_ref[0],
                 preferred_element_type=jnp.float32) + sm[_ROW_BD:_ROW_BD + 1, 0:H]
    x_new = _layernorm(y + ff, sm[_ROW_LN2G:_ROW_LN2G + 1, 0:H],
                       sm[_ROW_LN2B:_ROW_LN2B + 1, 0:H])
    x_ref[...] = x_new

    # Epilogue: pooler on the [CLS] token of each batch element.
    @pl.when(l == NLAYERS - 1)
    def _():
        cls = x_new.reshape(B, S, H)[:, 0:1, :].reshape(B, H)
        o_ref[...] = jnp.tanh(
            jnp.dot(cls.astype(jnp.bfloat16), wp_ref[...],
                    preferred_element_type=jnp.float32) + bp_ref[...])


def fused_roberta_call(emb2d, mbias, p):
    # One pallas_call for the whole forward; grid over layers streams per-layer weight blocks
    # (double-buffered by the Pallas pipeline) while the activation stays resident in VMEM.
    return pl.pallas_call(
        _encoder_layer_kernel,
        out_shape=jax.ShapeDtypeStruct((B, H), jnp.float32),
        grid_spec=pltpu.PrefetchScalarGridSpec(
            num_scalar_prefetch=0,
            grid=(NLAYERS,),
            in_specs=[
                pl.BlockSpec((B * S, H), lambda l: (0, 0)),        # emb (layer-invariant)
                pl.BlockSpec((B, 1, S), lambda l: (0, 0, 0)),      # mask bias
                pl.BlockSpec((2, H), lambda l: (0, 0)),            # emb LayerNorm
                pl.BlockSpec((1, H, 3 * H), lambda l: (l, 0, 0)),  # QKV weights (per layer)
                pl.BlockSpec((1, H, H), lambda l: (l, 0, 0)),      # Wo
                pl.BlockSpec((1, H, I), lambda l: (l, 0, 0)),      # FFN in
                pl.BlockSpec((1, I, H), lambda l: (l, 0, 0)),      # FFN out
                pl.BlockSpec((1, 8, 128), lambda l: (l, 0, 0)),    # bias/LN slab
                pl.BlockSpec((H, H), lambda l: (0, 0)),            # pooler W
                pl.BlockSpec((1, H), lambda l: (0, 0)),            # pooler b
            ],
            out_specs=pl.BlockSpec((B, H), lambda l: (0, 0)),      # written at last layer only
            scratch_shapes=[pltpu.VMEM((B * S, H), jnp.float32)],  # persistent activations
        ),
        compiler_params=pltpu.CompilerParams(
            dimension_semantics=("arbitrary",),        # sequential layer dependence
            vmem_limit_bytes=32 * 1024 * 1024,         # raise when scaling to real CodeBERT dims
        ),
    )(emb2d, mbias, p["embln"], p["wqkv"], p["wo_all"], p["wi_all"], p["wd_all"],
      p["slab"], p["wp"], p["bp"])


# ----------------------------- parameter init (deterministic, synthetic) -------------------
def init_encoder_params(key):
    keys = iter(jax.random.split(key, 64))
    nrm = lambda shape: 0.02 * jax.random.normal(next(keys), shape, jnp.float32)

    word_emb = nrm((VOCAB, H)).at[PAD_ID].set(0.0)
    pos_emb = nrm((MAX_POS, H)).at[PAD_ID].set(0.0)
    type_emb = nrm((1, H))
    embln = jnp.concatenate([jnp.ones((1, H), jnp.float32),
                             jnp.zeros((1, H), jnp.float32)], axis=0)       # (2, H)

    wqkv_l, wo_l, wi_l, wd_l, slab_l = [], [], [], [], []
    for _ in range(NLAYERS):
        wq, wk, wv = nrm((H, H)), nrm((H, H)), nrm((H, H))
        wo, wi, wd = nrm((H, H)), nrm((H, I)), nrm((I, H))
        bq = bk = bv = bo = bd = jnp.zeros((H,), jnp.float32)
        bi = jnp.zeros((I,), jnp.float32)
        ln1_g = ln2_g = jnp.ones((H,), jnp.float32)
        ln1_b = ln2_b = jnp.zeros((H,), jnp.float32)

        wqkv_l.append(jnp.concatenate([wq, wk, wv], axis=1))                # (H, 3H)
        wo_l.append(wo)
        wi_l.append(wi)
        wd_l.append(wd)

        # Pack all small per-layer params into one (8, 128) lane-padded slab (kept f32).
        slab = jnp.zeros((8, 128), jnp.float32)
        slab = slab.at[_ROW_BQKV, :3 * H].set(jnp.concatenate([bq, bk, bv]))
        slab = slab.at[_ROW_BO, :H].set(bo)
        slab = slab.at[_ROW_LN1G, :H].set(ln1_g)
        slab = slab.at[_ROW_LN1B, :H].set(ln1_b)
        slab = slab.at[_ROW_BI, :I].set(bi)
        slab = slab.at[_ROW_BD, :H].set(bd)
        slab = slab.at[_ROW_LN2G, :H].set(ln2_g)
        slab = slab.at[_ROW_LN2B, :H].set(ln2_b)
        slab_l.append(slab)

    # Big weights stored bf16 (MXU-native on v5e/v6e/v7x, half the VMEM/DMA bytes);
    # LayerNorm params / biases / embeddings stay f32 so all VPU/EUP math remains f32.
    return dict(word_emb=word_emb, pos_emb=pos_emb, type_emb=type_emb, embln=embln,
                wqkv=jnp.stack(wqkv_l).astype(jnp.bfloat16),
                wo_all=jnp.stack(wo_l).astype(jnp.bfloat16),
                wi_all=jnp.stack(wi_l).astype(jnp.bfloat16),
                wd_all=jnp.stack(wd_l).astype(jnp.bfloat16),
                slab=jnp.stack(slab_l),
                wp=nrm((H, H)).astype(jnp.bfloat16),
                bp=jnp.zeros((1, H), jnp.float32))


# ----------------------------- full encoder forward (returns pooled output) ----------------
@jax.jit
def roberta_pooled(ids, params):
    mask = (ids != PAD_ID)                                   # attention_mask = inputs.ne(1)
    mbias = jnp.where(mask, 0.0, -1e9).astype(jnp.float32)[:, None, :]      # (B, 1, S)

    # RoBERTa position ids: cumsum(mask) * mask + padding_idx
    pos_ids = jnp.cumsum(mask.astype(jnp.int32), axis=1) * mask.astype(jnp.int32) + PAD_ID

    emb = (params["word_emb"][ids] + params["pos_emb"][pos_ids]
           + params["type_emb"][0][None, None, :]).astype(jnp.float32)      # (B, S, H)
    emb2d = emb.reshape(B * S, H)   # fold (B, S) -> rows on the wrapper side (free plumbing)

    return fused_roberta_call(emb2d, mbias, params)          # == encoder(...)[1]


def model_forward(params_code, params_nl, code_inputs=None, nl_inputs=None):
    if code_inputs is not None:
        return roberta_pooled(code_inputs, params_code)
    else:
        return roberta_pooled(nl_inputs, params_nl)


# ----------------------------- main --------------------------------------------------------
if __name__ == "__main__":
    root = jax.random.PRNGKey(0)
    k_code, k_nl, k_ids = jax.random.split(root, 3)

    params_code = init_encoder_params(k_code)
    params_nl = init_encoder_params(k_nl)

    # deterministic token ids in [2, VOCAB); pad the tail of batch row 1 with PAD_ID
    code_inputs = jax.random.randint(k_ids, (B, S), 2, VOCAB, dtype=jnp.int32)
    code_inputs = code_inputs.at[1, -2:].set(PAD_ID)
    nl_inputs = code_inputs[:, ::-1]

    code_vec = model_forward(params_code, params_nl, code_inputs=code_inputs)
    nl_vec = model_forward(params_code, params_nl, nl_inputs=nl_inputs)

    jax.block_until_ready((code_vec, nl_vec))
    assert code_vec.shape == (B, H) and nl_vec.shape == (B, H)
    assert jnp.all(jnp.isfinite(code_vec)) and jnp.all(jnp.isfinite(nl_vec))
    print("KERNEL_OK")
</pallas_src>

<mosaic_0001>
module attributes {stable_mosaic.version = 11 : i64} {
  func.func @_encoder_layer_kernel(%arg0: i32, %arg1: memref<16x32xf32, #tpu.memory_space<vmem>>, %arg2: memref<2x1x8xf32, #tpu.memory_space<vmem>>, %arg3: memref<2x32xf32, #tpu.memory_space<vmem>>, %arg4: memref<1x32x96xbf16, #tpu.memory_space<vmem>>, %arg5: memref<1x32x32xbf16, #tpu.memory_space<vmem>>, %arg6: memref<1x32x64xbf16, #tpu.memory_space<vmem>>, %arg7: memref<1x64x32xbf16, #tpu.memory_space<vmem>>, %arg8: memref<1x8x128xf32, #tpu.memory_space<vmem>>, %arg9: memref<32x32xbf16, #tpu.memory_space<vmem>>, %arg10: memref<1x32xf32, #tpu.memory_space<vmem>>, %arg11: memref<2x32xf32, #tpu.memory_space<vmem>>, %arg12: memref<16x32xf32, #tpu.memory_space<vmem>>) attributes {dimension_semantics = [#tpu.dimension_semantics<arbitrary>], iteration_bounds = array<i64: 2>, scalar_prefetch = 0 : i64, scratch_operands = 1 : i64, tpu.core_type = #tpu.core_type<tc>, window_params = [{pipeline_mode = #tpu.pipeline_mode<synchronous>, transform_indices = @transform_0, window_bounds = array<i64: 16, 32>}, {pipeline_mode = #tpu.pipeline_mode<synchronous>, transform_indices = @transform_1, window_bounds = array<i64: 2, 1, 8>}, {pipeline_mode = #tpu.pipeline_mode<synchronous>, transform_indices = @transform_2, window_bounds = array<i64: 2, 32>}, {transform_indices = @transform_3, window_bounds = array<i64: 1, 32, 96>}, {transform_indices = @transform_4, window_bounds = array<i64: 1, 32, 32>}, {transform_indices = @transform_5, window_bounds = array<i64: 1, 32, 64>}, {transform_indices = @transform_6, window_bounds = array<i64: 1, 64, 32>}, {transform_indices = @transform_7, window_bounds = array<i64: 1, 8, 128>}, {pipeline_mode = #tpu.pipeline_mode<synchronous>, transform_indices = @transform_8, window_bounds = array<i64: 32, 32>}, {pipeline_mode = #tpu.pipeline_mode<synchronous>, transform_indices = @transform_9, window_bounds = array<i64: 1, 32>}, {pipeline_mode = #tpu.pipeline_mode<synchronous>, transform_indices = @transform_10, window_bounds = array<i64: 2, 32>}]} {
    %c0_i32 = arith.constant 0 : i32
    %0 = arith.cmpi eq, %arg0, %c0_i32 : i32
    %1 = arith.extui %0 : i1 to i32
    %c0_i32_0 = arith.constant 0 : i32
    %2 = arith.cmpi ne, %1, %c0_i32_0 : i32
    scf.if %2 {
      %c0_49 = arith.constant 0 : index
      %c0_50 = arith.constant 0 : index
      %151 = vector.load %arg1[%c0_49, %c0_50] : memref<16x32xf32, #tpu.memory_space<vmem>>, vector<16x32xf32>
      %c0_51 = arith.constant 0 : index
      %c0_52 = arith.constant 0 : index
      %152 = vector.load %arg3[%c0_51, %c0_52] : memref<2x32xf32, #tpu.memory_space<vmem>>, vector<1x32xf32>
      %c1 = arith.constant 1 : index
      %c0_53 = arith.constant 0 : index
      %153 = vector.load %arg3[%c1, %c0_53] : memref<2x32xf32, #tpu.memory_space<vmem>>, vector<1x32xf32>
      %cst_54 = arith.constant dense<0.000000e+00> : vector<16xf32>
      %154 = vector.multi_reduction <add>, %151, %cst_54 [1] : vector<16x32xf32> to vector<16xf32>
      %155 = vector.shape_cast %154 : vector<16xf32> to vector<16x1xf32>
      %cst_55 = arith.constant 3.200000e+01 : f32
      %156 = vector.broadcast %cst_55 : f32 to vector<16x1xf32>
      %157 = arith.divf %155, %156 : vector<16x1xf32>
      %158 = vector.broadcast %157 : vector<16x1xf32> to vector<16x32xf32>
      %159 = arith.subf %151, %158 : vector<16x32xf32>
      %160 = arith.mulf %159, %159 : vector<16x32xf32>
      %cst_56 = arith.constant dense<0.000000e+00> : vector<16xf32>
      %161 = vector.multi_reduction <add>, %160, %cst_56 [1] : vector<16x32xf32> to vector<16xf32>
      %162 = vector.shape_cast %161 : vector<16xf32> to vector<16x1xf32>
      %cst_57 = arith.constant 3.200000e+01 : f32
      %163 = vector.broadcast %cst_57 : f32 to vector<16x1xf32>
      %164 = arith.divf %162, %163 : vector<16x1xf32>
      %165 = vector.broadcast %157 : vector<16x1xf32> to vector<16x32xf32>
      %166 = arith.subf %151, %165 : vector<16x32xf32>
      %cst_58 = arith.constant 9.99999974E-6 : f32
      %167 = vector.broadcast %cst_58 : f32 to vector<16x1xf32>
      %168 = arith.addf %164, %167 : vector<16x1xf32>
      %169 = math.rsqrt %168 : vector<16x1xf32>
      %170 = vector.broadcast %169 : vector<16x1xf32> to vector<16x32xf32>
      %171 = arith.mulf %166, %170 : vector<16x32xf32>
      %172 = vector.broadcast %152 : vector<1x32xf32> to vector<16x32xf32>
      %173 = arith.mulf %171, %172 : vector<16x32xf32>
      %174 = vector.broadcast %153 : vector<1x32xf32> to vector<16x32xf32>
      %175 = arith.addf %173, %174 : vector<16x32xf32>
      %c0_59 = arith.constant 0 : index
      %c0_60 = arith.constant 0 : index
      %176 = vector.load %arg12[%c0_59, %c0_60] : memref<16x32xf32, #tpu.memory_space<vmem>>, vector<16x32xf32>
      tpu.vector_store %arg12[%c0_59, %c0_60], %175 {strides = array<i32>} : memref<16x32xf32, #tpu.memory_space<vmem>>, vector<16x32xf32>,
    } else {
    }
    %c0 = arith.constant 0 : index
    %c0_1 = arith.constant 0 : index
    %3 = vector.load %arg12[%c0, %c0_1] : memref<16x32xf32, #tpu.memory_space<vmem>>, vector<16x32xf32>
    %c0_2 = arith.constant 0 : index
    %c0_3 = arith.constant 0 : index
    %c0_4 = arith.constant 0 : index
    %4 = vector.load %arg8[%c0_2, %c0_3, %c0_4] : memref<1x8x128xf32, #tpu.memory_space<vmem>>, vector<1x8x128xf32>
    %5 = vector.shape_cast %4 : vector<1x8x128xf32> to vector<8x128xf32>
    %c0_5 = arith.constant 0 : index
    %c0_6 = arith.constant 0 : index
    %c0_7 = arith.constant 0 : index
    %6 = vector.load %arg2[%c0_5, %c0_6, %c0_7] : memref<2x1x8xf32, #tpu.memory_space<vmem>>, vector<2x1x8xf32>
    %7 = vector.shape_cast %6 : vector<2x1x8xf32> to vector<2x1x8xf32>
    %8 = vector.broadcast %7 : vector<2x1x8xf32> to vector<2x8x8xf32>
    %9 = arith.truncf %3 : vector<16x32xf32> to vector<16x32xbf16>
    %c0_8 = arith.constant 0 : index
    %c0_9 = arith.constant 0 : index
    %c0_10 = arith.constant 0 : index
    %10 = vector.load %arg4[%c0_8, %c0_9, %c0_10] : memref<1x32x96xbf16, #tpu.memory_space<vmem>>, vector<1x32x96xbf16>
    %11 = vector.shape_cast %10 : vector<1x32x96xbf16> to vector<32x96xbf16>
    %cst = arith.constant dense<0.000000e+00> : vector<16x96xf32>
    %12 = tpu.matmul %9, %11, %cst {dimension_numbers = #tpu.dot_dimension_numbers<[1], [0], [0], [1], [0, 0, 1, 1], [], []>} : vector<16x32xbf16>, vector<32x96xbf16>, vector<16x96xf32> -> vector<16x96xf32>
    %13 = vector.extract_strided_slice %5 {offsets = [0, 0], sizes = [1, 96], strides = [1, 1]} : vector<8x128xf32> to vector<1x96xf32>
    %14 = vector.broadcast %13 : vector<1x96xf32> to vector<16x96xf32>
    %15 = arith.addf %12, %14 : vector<16x96xf32>
    %16 = vector.extract_strided_slice %15 {offsets = [0, 0], sizes = [16, 32], strides = [1, 1]} : vector<16x96xf32> to vector<16x32xf32>
    %cst_11 = arith.constant 2.500000e-01 : f32
    %17 = vector.broadcast %cst_11 : f32 to vector<16x32xf32>
    %18 = arith.mulf %16, %17 : vector<16x32xf32>
    %19 = arith.truncf %18 : vector<16x32xf32> to vector<16x32xbf16>
    %20 = vector.shape_cast %19 : vector<16x32xbf16> to vector<2x8x32xbf16>
    %21 = vector.extract_strided_slice %15 {offsets = [0, 32], sizes = [16, 32], strides = [1, 1]} : vector<16x96xf32> to vector<16x32xf32>
    %22 = arith.truncf %21 : vector<16x32xf32> to vector<16x32xbf16>
    %23 = vector.shape_cast %22 : vector<16x32xbf16> to vector<2x8x32xbf16>
    %24 = vector.extract_strided_slice %15 {offsets = [0, 64], sizes = [16, 32], strides = [1, 1]} : vector<16x96xf32> to vector<16x32xf32>
    %25 = arith.truncf %24 : vector<16x32xf32> to vector<16x32xbf16>
    %26 = vector.shape_cast %25 : vector<16x32xbf16> to vector<2x8x32xbf16>
    %27 = vector.extract_strided_slice %20 {offsets = [0, 0, 0], sizes = [2, 8, 16], strides = [1, 1, 1]} : vector<2x8x32xbf16> to vector<2x8x16xbf16>
    %28 = vector.extract_strided_slice %23 {offsets = [0, 0, 0], sizes = [2, 8, 16], strides = [1, 1, 1]} : vector<2x8x32xbf16> to vector<2x8x16xbf16>
    "tpu.trace_start"() <{level = 10 : i32, message = "bqd,bkd->bqk"}> : () -> ()
    %cst_12 = arith.constant dense<0.000000e+00> : vector<2x8x8xf32>
    %29 = tpu.matmul %27, %28, %cst_12 {dimension_numbers = #tpu.dot_dimension_numbers<[2], [2], [1], [1], [0, 0, 0, 1, 1, 1], [0], [0]>} : vector<2x8x16xbf16>, vector<2x8x16xbf16>, vector<2x8x8xf32> -> vector<2x8x8xf32>
    "tpu.trace_stop"() : () -> ()
    %30 = arith.addf %29, %8 : vector<2x8x8xf32>
    %cst_13 = arith.constant dense<0xFF800000> : vector<2x8xf32>
    %31 = vector.multi_reduction <maximumf>, %30, %cst_13 [2] : vector<2x8x8xf32> to vector<2x8xf32>
    %32 = vector.shape_cast %31 : vector<2x8xf32> to vector<2x8x1xf32>
    %33 = vector.broadcast %32 : vector<2x8x1xf32> to vector<2x8x8xf32>
    %34 = arith.subf %30, %33 : vector<2x8x8xf32>
    %35 = math.exp %34 : vector<2x8x8xf32>
    %cst_14 = arith.constant dense<0.000000e+00> : vector<2x8xf32>
    %36 = vector.multi_reduction <add>, %35, %cst_14 [2] : vector<2x8x8xf32> to vector<2x8xf32>
    %37 = vector.shape_cast %36 : vector<2x8xf32> to vector<2x8x1xf32>
    %38 = tpu.reciprocal %37 {approx = true} : vector<2x8x1xf32> -> vector<2x8x1xf32>
    %39 = vector.broadcast %38 : vector<2x8x1xf32> to vector<2x8x8xf32>
    %40 = arith.mulf %35, %39 : vector<2x8x8xf32>
    %41 = arith.truncf %40 : vector<2x8x8xf32> to vector<2x8x8xbf16>
    %42 = vector.extract_strided_slice %26 {offsets = [0, 0, 0], sizes = [2, 8, 16], strides = [1, 1, 1]} : vector<2x8x32xbf16> to vector<2x8x16xbf16>
    "tpu.trace_start"() <{level = 10 : i32, message = "bqk,bkd->bqd"}> : () -> ()
    %cst_15 = arith.constant dense<0.000000e+00> : vector<2x8x16xf32>
    %43 = tpu.matmul %41, %42, %cst_15 {dimension_numbers = #tpu.dot_dimension_numbers<[2], [1], [1], [2], [0, 0, 0, 1, 1, 2], [0], [0]>} : vector<2x8x8xbf16>, vector<2x8x16xbf16>, vector<2x8x16xf32> -> vector<2x8x16xf32>
    "tpu.trace_stop"() : () -> ()
    %44 = vector.extract_strided_slice %20 {offsets = [0, 0, 16], sizes = [2, 8, 16], strides = [1, 1, 1]} : vector<2x8x32xbf16> to vector<2x8x16xbf16>
    %45 = vector.extract_strided_slice %23 {offsets = [0, 0, 16], sizes = [2, 8, 16], strides = [1, 1, 1]} : vector<2x8x32xbf16> to vector<2x8x16xbf16>
    "tpu.trace_start"() <{level = 10 : i32, message = "bqd,bkd->bqk"}> : () -> ()
    %cst_16 = arith.constant dense<0.000000e+00> : vector<2x8x8xf32>
    %46 = tpu.matmul %44, %45, %cst_16 {dimension_numbers = #tpu.dot_dimension_numbers<[2], [2], [1], [1], [0, 0, 0, 1, 1, 1], [0], [0]>} : vector<2x8x16xbf16>, vector<2x8x16xbf16>, vector<2x8x8xf32> -> vector<2x8x8xf32>
    "tpu.trace_stop"() : () -> ()
    %47 = arith.addf %46, %8 : vector<2x8x8xf32>
    %cst_17 = arith.constant dense<0xFF800000> : vector<2x8xf32>
    %48 = vector.multi_reduction <maximumf>, %47, %cst_17 [2] : vector<2x8x8xf32> to vector<2x8xf32>
    %49 = vector.shape_cast %48 : vector<2x8xf32> to vector<2x8x1xf32>
    %50 = vector.broadcast %49 : vector<2x8x1xf32> to vector<2x8x8xf32>
    %51 = arith.subf %47, %50 : vector<2x8x8xf32>
    %52 = math.exp %51 : vector<2x8x8xf32>
    %cst_18 = arith.constant dense<0.000000e+00> : vector<2x8xf32>
    %53 = vector.multi_reduction <add>, %52, %cst_18 [2] : vector<2x8x8xf32> to vector<2x8xf32>
    %54 = vector.shape_cast %53 : vector<2x8xf32> to vector<2x8x1xf32>
    %55 = tpu.reciprocal %54 {approx = true} : vector<2x8x1xf32> -> vector<2x8x1xf32>
    %56 = vector.broadcast %55 : vector<2x8x1xf32> to vector<2x8x8xf32>
    %57 = arith.mulf %52, %56 : vector<2x8x8xf32>
    %58 = arith.truncf %57 : vector<2x8x8xf32> to vector<2x8x8xbf16>
    %59 = vector.extract_strided_slice %26 {offsets = [0, 0, 16], sizes = [2, 8, 16], strides = [1, 1, 1]} : vector<2x8x32xbf16> to vector<2x8x16xbf16>
    "tpu.trace_start"() <{level = 10 : i32, message = "bqk,bkd->bqd"}> : () -> ()
    %cst_19 = arith.constant dense<0.000000e+00> : vector<2x8x16xf32>
    %60 = tpu.matmul %58, %59, %cst_19 {dimension_numbers = #tpu.dot_dimension_numbers<[2], [1], [1], [2], [0, 0, 0, 1, 1, 2], [0], [0]>} : vector<2x8x8xbf16>, vector<2x8x16xbf16>, vector<2x8x16xf32> -> vector<2x8x16xf32>
    "tpu.trace_stop"() : () -> ()
    %61 = tpu.concatenate %43, %60 in 2 : vector<2x8x16xf32>, vector<2x8x16xf32> -> vector<2x8x32xf32>
    %62 = vector.shape_cast %61 : vector<2x8x32xf32> to vector<16x32xf32>
    %63 = arith.truncf %62 : vector<16x32xf32> to vector<16x32xbf16>
    %c0_20 = arith.constant 0 : index
    %c0_21 = arith.constant 0 : index
    %c0_22 = arith.constant 0 : index
    %64 = vector.load %arg5[%c0_20, %c0_21, %c0_22] : memref<1x32x32xbf16, #tpu.memory_space<vmem>>, vector<1x32x32xbf16>
    %65 = vector.shape_cast %64 : vector<1x32x32xbf16> to vector<32x32xbf16>
    %cst_23 = arith.constant dense<0.000000e+00> : vector<16x32xf32>
    %66 = tpu.matmul %63, %65, %cst_23 {dimension_numbers = #tpu.dot_dimension_numbers<[1], [0], [0], [1], [0, 0, 1, 1], [], []>} : vector<16x32xbf16>, vector<32x32xbf16>, vector<16x32xf32> -> vector<16x32xf32>
    %67 = vector.extract_strided_slice %5 {offsets = [1, 0], sizes = [1, 32], strides = [1, 1]} : vector<8x128xf32> to vector<1x32xf32>
    %68 = vector.broadcast %67 : vector<1x32xf32> to vector<16x32xf32>
    %69 = arith.addf %66, %68 : vector<16x32xf32>
    %70 = arith.addf %3, %69 : vector<16x32xf32>
    %71 = vector.extract_strided_slice %5 {offsets = [2, 0], sizes = [1, 32], strides = [1, 1]} : vector<8x128xf32> to vector<1x32xf32>
    %72 = vector.extract_strided_slice %5 {offsets = [3, 0], sizes = [1, 32], strides = [1, 1]} : vector<8x128xf32> to vector<1x32xf32>
    %cst_24 = arith.constant dense<0.000000e+00> : vector<16xf32>
    %73 = vector.multi_reduction <add>, %70, %cst_24 [1] : vector<16x32xf32> to vector<16xf32>
    %74 = vector.shape_cast %73 : vector<16xf32> to vector<16x1xf32>
    %cst_25 = arith.constant 3.200000e+01 : f32
    %75 = vector.broadcast %cst_25 : f32 to vector<16x1xf32>
    %76 = arith.divf %74, %75 : vector<16x1xf32>
    %77 = vector.broadcast %76 : vector<16x1xf32> to vector<16x32xf32>
    %78 = arith.subf %70, %77 : vector<16x32xf32>
    %79 = arith.mulf %78, %78 : vector<16x32xf32>
    %cst_26 = arith.constant dense<0.000000e+00> : vector<16xf32>
    %80 = vector.multi_reduction <add>, %79, %cst_26 [1] : vector<16x32xf32> to vector<16xf32>
    %81 = vector.shape_cast %80 : vector<16xf32> to vector<16x1xf32>
    %cst_27 = arith.constant 3.200000e+01 : f32
    %82 = vector.broadcast %cst_27 : f32 to vector<16x1xf32>
    %83 = arith.divf %81, %82 : vector<16x1xf32>
    %84 = vector.broadcast %76 : vector<16x1xf32> to vector<16x32xf32>
    %85 = arith.subf %70, %84 : vector<16x32xf32>
    %cst_28 = arith.constant 9.99999974E-6 : f32
    %86 = vector.broadcast %cst_28 : f32 to vector<16x1xf32>
    %87 = arith.addf %83, %86 : vector<16x1xf32>
    %88 = math.rsqrt %87 : vector<16x1xf32>
    %89 = vector.broadcast %88 : vector<16x1xf32> to vector<16x32xf32>
    %90 = arith.mulf %85, %89 : vector<16x32xf32>
    %91 = vector.broadcast %71 : vector<1x32xf32> to vector<16x32xf32>
    %92 = arith.mulf %90, %91 : vector<16x32xf32>
    %93 = vector.broadcast %72 : vector<1x32xf32> to vector<16x32xf32>
    %94 = arith.addf %92, %93 : vector<16x32xf32>
    %95 = arith.truncf %94 : vector<16x32xf32> to vector<16x32xbf16>
    %c0_29 = arith.constant 0 : index
    %c0_30 = arith.constant 0 : index
    %c0_31 = arith.constant 0 : index
    %96 = vector.load %arg6[%c0_29, %c0_30, %c0_31] : memref<1x32x64xbf16, #tpu.memory_space<vmem>>, vector<1x32x64xbf16>
    %97 = vector.shape_cast %96 : vector<1x32x64xbf16> to vector<32x64xbf16>
    %cst_32 = arith.constant dense<0.000000e+00> : vector<16x64xf32>
    %98 = tpu.matmul %95, %97, %cst_32 {dimension_numbers = #tpu.dot_dimension_numbers<[1], [0], [0], [1], [0, 0, 1, 1], [], []>} : vector<16x32xbf16>, vector<32x64xbf16>, vector<16x64xf32> -> vector<16x64xf32>
    %99 = vector.extract_strided_slice %5 {offsets = [4, 0], sizes = [1, 64], strides = [1, 1]} : vector<8x128xf32> to vector<1x64xf32>
    %100 = vector.broadcast %99 : vector<1x64xf32> to vector<16x64xf32>
    %101 = arith.addf %98, %100 : vector<16x64xf32>
    %cst_33 = arith.constant 5.000000e-01 : f32
    %102 = vector.broadcast %cst_33 : f32 to vector<16x64xf32>
    %103 = arith.mulf %102, %101 : vector<16x64xf32>
    %cst_34 = arith.constant 4.471500e-02 : f32
    %104 = vector.broadcast %cst_34 : f32 to vector<16x64xf32>
    %105 = arith.mulf %104, %101 : vector<16x64xf32>
    %106 = arith.mulf %105, %101 : vector<16x64xf32>
    %107 = arith.mulf %106, %101 : vector<16x64xf32>
    %108 = arith.addf %101, %107 : vector<16x64xf32>
    %cst_35 = arith.constant 0.797884583 : f32
    %109 = vector.broadcast %cst_35 : f32 to vector<16x64xf32>
    %110 = arith.mulf %109, %108 : vector<16x64xf32>
    %111 = math.tanh %110 : vector<16x64xf32>
    %cst_36 = arith.constant 1.000000e+00 : f32
    %112 = vector.broadcast %cst_36 : f32 to vector<16x64xf32>
    %113 = arith.addf %112, %111 : vector<16x64xf32>
    %114 = arith.mulf %103, %113 : vector<16x64xf32>
    %115 = arith.truncf %114 : vector<16x64xf32> to vector<16x64xbf16>
    %c0_37 = arith.constant 0 : index
    %c0_38 = arith.constant 0 : index
    %c0_39 = arith.constant 0 : index
    %116 = vector.load %arg7[%c0_37, %c0_38, %c0_39] : memref<1x64x32xbf16, #tpu.memory_space<vmem>>, vector<1x64x32xbf16>
    %117 = vector.shape_cast %116 : vector<1x64x32xbf16> to vector<64x32xbf16>
    %cst_40 = arith.constant dense<0.000000e+00> : vector<16x32xf32>
    %118 = tpu.matmul %115, %117, %cst_40 {dimension_numbers = #tpu.dot_dimension_numbers<[1], [0], [0], [1], [0, 0, 1, 1], [], []>} : vector<16x64xbf16>, vector<64x32xbf16>, vector<16x32xf32> -> vector<16x32xf32>
    %119 = vector.extract_strided_slice %5 {offsets = [5, 0], sizes = [1, 32], strides = [1, 1]} : vector<8x128xf32> to vector<1x32xf32>
    %120 = vector.broadcast %119 : vector<1x32xf32> to vector<16x32xf32>
    %121 = arith.addf %118, %120 : vector<16x32xf32>
    %122 = arith.addf %94, %121 : vector<16x32xf32>
    %123 = vector.extract_strided_slice %5 {offsets = [6, 0], sizes = [1, 32], strides = [1, 1]} : vector<8x128xf32> to vector<1x32xf32>
    %124 = vector.extract_strided_slice %5 {offsets = [7, 0], sizes = [1, 32], strides = [1, 1]} : vector<8x128xf32> to vector<1x32xf32>
    %cst_41 = arith.constant dense<0.000000e+00> : vector<16xf32>
    %125 = vector.multi_reduction <add>, %122, %cst_41 [1] : vector<16x32xf32> to vector<16xf32>
    %126 = vector.shape_cast %125 : vector<16xf32> to vector<16x1xf32>
    %cst_42 = arith.constant 3.200000e+01 : f32
    %127 = vector.broadcast %cst_42 : f32 to vector<16x1xf32>
    %128 = arith.divf %126, %127 : vector<16x1xf32>
    %129 = vector.broadcast %128 : vector<16x1xf32> to vector<16x32xf32>
    %130 = arith.subf %122, %129 : vector<16x32xf32>
    %131 = arith.mulf %130, %130 : vector<16x32xf32>
    %cst_43 = arith.constant dense<0.000000e+00> : vector<16xf32>
    %132 = vector.multi_reduction <add>, %131, %cst_43 [1] : vector<16x32xf32> to vector<16xf32>
    %133 = vector.shape_cast %132 : vector<16xf32> to vector<16x1xf32>
    %cst_44 = arith.constant 3.200000e+01 : f32
    %134 = vector.broadcast %cst_44 : f32 to vector<16x1xf32>
    %135 = arith.divf %133, %134 : vector<16x1xf32>
    %136 = vector.broadcast %128 : vector<16x1xf32> to vector<16x32xf32>
    %137 = arith.subf %122, %136 : vector<16x32xf32>
    %cst_45 = arith.constant 9.99999974E-6 : f32
    %138 = vector.broadcast %cst_45 : f32 to vector<16x1xf32>
    %139 = arith.addf %135, %138 : vector<16x1xf32>
    %140 = math.rsqrt %139 : vector<16x1xf32>
    %141 = vector.broadcast %140 : vector<16x1xf32> to vector<16x32xf32>
    %142 = arith.mulf %137, %141 : vector<16x32xf32>
    %143 = vector.broadcast %123 : vector<1x32xf32> to vector<16x32xf32>
    %144 = arith.mulf %142, %143 : vector<16x32xf32>
    %145 = vector.broadcast %124 : vector<1x32xf32> to vector<16x32xf32>
    %146 = arith.addf %144, %145 : vector<16x32xf32>
    %c0_46 = arith.constant 0 : index
    %c0_47 = arith.constant 0 : index
    %147 = vector.load %arg12[%c0_46, %c0_47] : memref<16x32xf32, #tpu.memory_space<vmem>>, vector<16x32xf32>
    tpu.vector_store %arg12[%c0_46, %c0_47], %146 {strides = array<i32>} : memref<16x32xf32, #tpu.memory_space<vmem>>, vector<16x32xf32>,
    %c1_i32 = arith.constant 1 : i32
    %148 = arith.cmpi eq, %arg0, %c1_i32 : i32
    %149 = arith.extui %148 : i1 to i32
    %c0_i32_48 = arith.constant 0 : i32
    %150 = arith.cmpi ne, %149, %c0_i32_48 : i32
    scf.if %150 {
      %151 = vector.shape_cast %146 : vector<16x32xf32> to vector<2x8x32xf32>
      %152 = vector.extract_strided_slice %151 {offsets = [0, 0, 0], sizes = [2, 1, 32], strides = [1, 1, 1]} : vector<2x8x32xf32> to vector<2x1x32xf32>
      %153 = vector.shape_cast %152 : vector<2x1x32xf32> to vector<2x32xf32>
      %154 = arith.truncf %153 : vector<2x32xf32> to vector<2x32xbf16>
      %c0_49 = arith.constant 0 : index
      %c0_50 = arith.constant 0 : index
      %155 = vector.load %arg9[%c0_49, %c0_50] : memref<32x32xbf16, #tpu.memory_space<vmem>>, vector<32x32xbf16>
      %cst_51 = arith.constant dense<0.000000e+00> : vector<2x32xf32>
      %156 = tpu.matmul %154, %155, %cst_51 {dimension_numbers = #tpu.dot_dimension_numbers<[1], [0], [0], [1], [0, 0, 1, 1], [], []>} : vector<2x32xbf16>, vector<32x32xbf16>, vector<2x32xf32> -> vector<2x32xf32>
      %c0_52 = arith.constant 0 : index
      %c0_53 = arith.constant 0 : index
      %157 = vector.load %arg10[%c0_52, %c0_53] : memref<1x32xf32, #tpu.memory_space<vmem>>, vector<1x32xf32>
      %158 = vector.broadcast %157 : vector<1x32xf32> to vector<2x32xf32>
      %159 = arith.addf %156, %158 : vector<2x32xf32>
      %160 = math.tanh %159 : vector<2x32xf32>
      %c0_54 = arith.constant 0 : index
      %c0_55 = arith.constant 0 : index
      %161 = vector.load %arg11[%c0_54, %c0_55] : memref<2x32xf32, #tpu.memory_space<vmem>>, vector<2x32xf32>
      tpu.vector_store %arg11[%c0_54, %c0_55], %160 {strides = array<i32>} : memref<2x32xf32, #tpu.memory_space<vmem>>, vector<2x32xf32>,
    } else {
    }
    return
  }
  func.func @transform_0(%arg0: i32) -> (i32, i32) {
    %c0_i32 = arith.constant 0 : i32
    %c0_i32_0 = arith.constant 0 : i32
    %c0_i32_1 = arith.constant 0 : i32
    return %c0_i32, %c0_i32_0 : i32, i32
  }
  func.func @transform_1(%arg0: i32) -> (i32, i32, i32) {
    %c0_i32 = arith.constant 0 : i32
    %c0_i32_0 = arith.constant 0 : i32
    %c0_i32_1 = arith.constant 0 : i32
    %c0_i32_2 = arith.constant 0 : i32
    return %c0_i32, %c0_i32_0, %c0_i32_1 : i32, i32, i32
  }
  func.func @transform_2(%arg0: i32) -> (i32, i32) {
    %c0_i32 = arith.constant 0 : i32
    %c0_i32_0 = arith.constant 0 : i32
    %c0_i32_1 = arith.constant 0 : i32
    return %c0_i32, %c0_i32_0 : i32, i32
  }
  func.func @transform_3(%arg0: i32) -> (i32, i32, i32) {
    %c0_i32 = arith.constant 0 : i32
    %c0_i32_0 = arith.constant 0 : i32
    %c0_i32_1 = arith.constant 0 : i32
    return %arg0, %c0_i32, %c0_i32_0 : i32, i32, i32
  }
  func.func @transform_4(%arg0: i32) -> (i32, i32, i32) {
    %c0_i32 = arith.constant 0 : i32
    %c0_i32_0 = arith.constant 0 : i32
    %c0_i32_1 = arith.constant 0 : i32
    return %arg0, %c0_i32, %c0_i32_0 : i32, i32, i32
  }
  func.func @transform_5(%arg0: i32) -> (i32, i32, i32) {
    %c0_i32 = arith.constant 0 : i32
    %c0_i32_0 = arith.constant 0 : i32
    %c0_i32_1 = arith.constant 0 : i32
    return %arg0, %c0_i32, %c0_i32_0 : i32, i32, i32
  }
  func.func @transform_6(%arg0: i32) -> (i32, i32, i32) {
    %c0_i32 = arith.constant 0 : i32
    %c0_i32_0 = arith.constant 0 : i32
    %c0_i32_1 = arith.constant 0 : i32
    return %arg0, %c0_i32, %c0_i32_0 : i32, i32, i32
  }
  func.func @transform_7(%arg0: i32) -> (i32, i32, i32) {
    %c0_i32 = arith.constant 0 : i32
    %c0_i32_0 = arith.constant 0 : i32
    %c0_i32_1 = arith.constant 0 : i32
    return %arg0, %c0_i32, %c0_i32_0 : i32, i32, i32
  }
  func.func @transform_8(%arg0: i32) -> (i32, i32) {
    %c0_i32 = arith.constant 0 : i32
    %c0_i32_0 = arith.constant 0 : i32
    %c0_i32_1 = arith.constant 0 : i32
    return %c0_i32, %c0_i32_0 : i32, i32
  }
  func.func @transform_9(%arg0: i32) -> (i32, i32) {
    %c0_i32 = arith.constant 0 : i32
    %c0_i32_0 = arith.constant 0 : i32
    %c0_i32_1 = arith.constant 0 : i32
    return %c0_i32, %c0_i32_0 : i32, i32
  }
  func.func @transform_10(%arg0: i32) -> (i32, i32) {
    %c0_i32 = arith.constant 0 : i32
    %c0_i32_0 = arith.constant 0 : i32
    %c0_i32_1 = arith.constant 0 : i32
    return %c0_i32, %c0_i32_0 : i32, i32
  }
}

</mosaic_0001>

<llo_original>
// kernel: roberta_pooled.1
$region0: #{roberta_pooled.1}
  #allocation0 [shape = 'u32[]', space=smem, size = 0x4, offset = 0x4, fixed_abs, tag = 'smem constant byte address 0x4 - core index']
  #allocation1 [shape = 'u32[144,128]{1,0:T(1,128)}', space=vmem, size = 0x12000, scoped, tag = 'internal scratch']
  #allocation2 [shape = 'f32[16,32]{1,0:T(8,128)}', space=vmem, size = 0x2000, scoped, tag = 'scratch operand']
  %s0 = inlined_call_operand.vmem [shape: f32[16,32], index: 0, kind: input, shape index: {}]
  %s1 = inlined_call_operand.vmem [shape: f32[2,1,8], index: 1, kind: input, shape index: {}]
  %s2 = inlined_call_operand.vmem [shape: f32[2,32], index: 2, kind: input, shape index: {}]
  %s3 = inlined_call_operand.vmem [shape: bf16[2,32,96], index: 3, kind: input, shape index: {}]
  %s4 = inlined_call_operand.vmem [shape: bf16[2,32,32], index: 4, kind: input, shape index: {}]
  %s5 = inlined_call_operand.vmem [shape: bf16[2,32,64], index: 5, kind: input, shape index: {}]
  %s6 = inlined_call_operand.vmem [shape: bf16[2,64,32], index: 6, kind: input, shape index: {}]
  %s7 = inlined_call_operand.vmem [shape: f32[2,8,128], index: 7, kind: input, shape index: {}]
  %s8 = inlined_call_operand.vmem [shape: bf16[32,32], index: 8, kind: input, shape index: {}]
  %s9 = inlined_call_operand.vmem [shape: f32[1,32], index: 9, kind: input, shape index: {}]
  %s10 = inlined_call_operand.hbm [shape: f32[2,32], index: 10, kind: output, shape index: {}]
  %s11 = sld [smem:[#allocation0]]
  $region81: #{roberta_pooled.1} parent=0
    _
  %s13 = ssub.s32 1, %s11
  %s14 = scalar_select 0, %s13, %s11
  $region1: #{roberta_pooled.1} parent=0
    #allocation3 [shape = 'u8[1024]{0}', space=vmem, size = 0x400, scoped, tag = 'output window, operand 0, single buffered']
    #allocation4 [shape = 's32[2]{0}', space=sflag, size = 0x8, scoped, tag = 'scoped memory for roberta_pooled.1']
    %15 = vsyncpa [#allocation4], 0
    loop: start=0, step=1, limit=4
    $region2: #{roberta_pooled.1} parent=1 // loop_pre_header
      _
    $region3: #{roberta_pooled.1} parent=1 // loop_header
      %s17 = sphi 0, %s21
      %p18 = scmp.ge.s32.totalorder %s17, 4
      %s25 = sphi 0, %s25
      %s27 = sphi 0, %s25
      %s28 = sphi 0, %s27
      %s42 = sphi 0, %s28
      %s46 = sphi 0, %s46
      %s48 = sphi 0, %s46
      %s49 = sphi 0, %s48
      %s63 = sphi 0, %s49
      %s67 = sphi 0, %s67
      %s69 = sphi 0, %s67
      %s70 = sphi 0, %s69
      %s84 = sphi 0, %s70
      %s90 = sphi 0, %s92
      %s93 = sphi 0, %s90
      %s94 = sphi 0, %s93
      %s110 = sphi 0, %s94
      %s116 = sphi 0, %s118
      %s119 = sphi 0, %s116
      %s120 = sphi 0, %s119
      %s136 = sphi 0, %s120
      %s142 = sphi 0, %s144
      %s145 = sphi 0, %s142
      %s146 = sphi 0, %s145
      %s162 = sphi 0, %s146
      %s168 = sphi 0, %s170
      %s171 = sphi 0, %s168
      %s172 = sphi 0, %s171
      %s188 = sphi 0, %s172
      %s194 = sphi 0, %s196
      %s197 = sphi 0, %s194
      %s198 = sphi 0, %s197
      %s214 = sphi 0, %s198
      %s218 = sphi 0, %s218
      %s220 = sphi 0, %s218
      %s221 = sphi 0, %s220
      %s235 = sphi 0, %s221
      %s239 = sphi 0, %s239
      %s241 = sphi 0, %s239
      %s242 = sphi 0, %s241
      %s256 = sphi 0, %s242
      %s260 = sphi 0, %s260
      %s262 = sphi 0, %s260
      %s263 = sphi 0, %s262
      %s277 = sphi 0, %s263
    $region4: #{roberta_pooled.1} parent=1 // loop_header_branch
      %20 = sbr.rel (%p18) target = $region8
    $region5: #{roberta_pooled.1} parent=1 // loop_body
      %s22 = ssub.s32 %s17, 1
      %s23 = ssub.s32 %s17, 2
      %s24 = sadd.s32 %s17, 1
      %s26 = sadd.s32 %s25, 1
      %p29 = scmp.eq.s32.totalorder %s17, 1
      %p30 = scmp.ne.s32.totalorder %s25, %s27
      %p31 = scmp.eq.s32.totalorder %s17, 0
      %p32 = por %p30, %p31
      %p33 = scmp.ne.s32.totalorder %s25, %s27
      %p34 = scmp.eq.s32.totalorder %s22, 1
      %p35 = por %p33, %p34
      %p36 = scmp.ne.s32.totalorder %s27, %s28
      %p37 = scmp.eq.s32.totalorder %s22, 0
      %p38 = por %p36, %p37
      %p39 = scmp.ne.s32.totalorder %s27, %s28
      %p40 = scmp.eq.s32.totalorder %s23, 1
      %p41 = por %p39, %p40
      %p43 = scmp.ne.s32.totalorder %s28, %s42
      %p44 = scmp.eq.s32.totalorder %s23, 0
      %p45 = por %p43, %p44
      %s47 = sadd.s32 %s46, 1
      %p50 = scmp.eq.s32.totalorder %s17, 1
      %p51 = scmp.ne.s32.totalorder %s46, %s48
      %p52 = scmp.eq.s32.totalorder %s17, 0
      %p53 = por %p51, %p52
      %p54 = scmp.ne.s32.totalorder %s46, %s48
      %p55 = scmp.eq.s32.totalorder %s22, 1
      %p56 = por %p54, %p55
      %p57 = scmp.ne.s32.totalorder %s48, %s49
      %p58 = scmp.eq.s32.totalorder %s22, 0
      %p59 = por %p57, %p58
      %p60 = scmp.ne.s32.totalorder %s48, %s49
      %p61 = scmp.eq.s32.totalorder %s23, 1
      %p62 = por %p60, %p61
      %p64 = scmp.ne.s32.totalorder %s49, %s63
      %p65 = scmp.eq.s32.totalorder %s23, 0
      %p66 = por %p64, %p65
      %s68 = sadd.s32 %s67, 1
      %p71 = scmp.eq.s32.totalorder %s17, 1
      %p72 = scmp.ne.s32.totalorder %s67, %s69
      %p73 = scmp.eq.s32.totalorder %s17, 0
      %p74 = por %p72, %p73
      %p75 = scmp.ne.s32.totalorder %s67, %s69
      %p76 = scmp.eq.s32.totalorder %s22, 1
      %p77 = por %p75, %p76
      %p78 = scmp.ne.s32.totalorder %s69, %s70
      %p79 = scmp.eq.s32.totalorder %s22, 0
      %p80 = por %p78, %p79
      %p81 = scmp.ne.s32.totalorder %s69, %s70
      %p82 = scmp.eq.s32.totalorder %s23, 1
      %p83 = por %p81, %p82
      %p85 = scmp.ne.s32.totalorder %s70, %s84
      %p86 = scmp.eq.s32.totalorder %s23, 0
      %p87 = por %p85, %p86
      %s88 = ssub.s32 %s17, %s24
      %p89 = scmp.eq.s32.totalorder %s88, 0
      %s91 = sadd.s32 %s90, 1
      %s92 = scalar_select %p89, %s90, %s91
      %p95 = pneg %p89
      %p96 = scmp.eq.s32.totalorder %s17, 1
      %p97 = por %p95, %p96
      %p98 = scmp.ne.s32.totalorder %s90, %s93
      %p99 = scmp.eq.s32.totalorder %s17, 0
      %p100 = por %p98, %p99
      %p101 = scmp.ne.s32.totalorder %s90, %s93
      %p102 = scmp.eq.s32.totalorder %s22, 1
      %p103 = por %p101, %p102
      %p104 = scmp.ne.s32.totalorder %s93, %s94
      %p105 = scmp.eq.s32.totalorder %s22, 0
      %p106 = por %p104, %p105
      %p107 = scmp.ne.s32.totalorder %s93, %s94
      %p108 = scmp.eq.s32.totalorder %s23, 1
      %p109 = por %p107, %p108
      %p111 = scmp.ne.s32.totalorder %s94, %s110
      %p112 = scmp.eq.s32.totalorder %s23, 0
      %p113 = por %p111, %p112
      %s114 = ssub.s32 %s17, %s24
      %p115 = scmp.eq.s32.totalorder %s114, 0
      %s117 = sadd.s32 %s116, 1
      %s118 = scalar_select %p115, %s116, %s117
      %p121 = pneg %p115
      %p122 = scmp.eq.s32.totalorder %s17, 1
      %p123 = por %p121, %p122
      %p124 = scmp.ne.s32.totalorder %s116, %s119
      %p125 = scmp.eq.s32.totalorder %s17, 0
      %p126 = por %p124, %p125
      %p127 = scmp.ne.s32.totalorder %s116, %s119
      %p128 = scmp.eq.s32.totalorder %s22, 1
      %p129 = por %p127, %p128
      %p130 = scmp.ne.s32.totalorder %s119, %s120
      %p131 = scmp.eq.s32.totalorder %s22, 0
      %p132 = por %p130, %p131
      %p133 = scmp.ne.s32.totalorder %s119, %s120
      %p134 = scmp.eq.s32.totalorder %s23, 1
      %p135 = por %p133, %p134
      %p137 = scmp.ne.s32.totalorder %s120, %s136
      %p138 = scmp.eq.s32.totalorder %s23, 0
      %p139 = por %p137, %p138
      %s140 = ssub.s32 %s17, %s24
      %p141 = scmp.eq.s32.totalorder %s140, 0
      %s143 = sadd.s32 %s142, 1
      %s144 = scalar_select %p141, %s142, %s143
      %p147 = pneg %p141
      %p148 = scmp.eq.s32.totalorder %s17, 1
      %p149 = por %p147, %p148
      %p150 = scmp.ne.s32.totalorder %s142, %s145
      %p151 = scmp.eq.s32.totalorder %s17, 0
      %p152 = por %p150, %p151
      %p153 = scmp.ne.s32.totalorder %s142, %s145
      %p154 = scmp.eq.s32.totalorder %s22, 1
      %p155 = por %p153, %p154
      %p156 = scmp.ne.s32.totalorder %s145, %s146
      %p157 = scmp.eq.s32.totalorder %s22, 0
      %p158 = por %p156, %p157
      %p159 = scmp.ne.s32.totalorder %s145, %s146
      %p160 = scmp.eq.s32.totalorder %s23, 1
      %p161 = por %p159, %p160
      %p163 = scmp.ne.s32.totalorder %s146, %s162
      %p164 = scmp.eq.s32.totalorder %s23, 0
      %p165 = por %p163, %p164
      %s166 = ssub.s32 %s17, %s24
      %p167 = scmp.eq.s32.totalorder %s166, 0
      %s169 = sadd.s32 %s168, 1
      %s170 = scalar_select %p167, %s168, %s169
      %p173 = pneg %p167
      %p174 = scmp.eq.s32.totalorder %s17, 1
      %p175 = por %p173, %p174
      %p176 = scmp.ne.s32.totalorder %s168, %s171
      %p177 = scmp.eq.s32.totalorder %s17, 0
      %p178 = por %p176, %p177
      %p179 = scmp.ne.s32.totalorder %s168, %s171
      %p180 = scmp.eq.s32.totalorder %s22, 1
      %p181 = por %p179, %p180
      %p182 = scmp.ne.s32.totalorder %s171, %s172
      %p183 = scmp.eq.s32.totalorder %s22, 0
      %p184 = por %p182, %p183
      %p185 = scmp.ne.s32.totalorder %s171, %s172
      %p186 = scmp.eq.s32.totalorder %s23, 1
      %p187 = por %p185, %p186
      %p189 = scmp.ne.s32.totalorder %s172, %s188
      %p190 = scmp.eq.s32.totalorder %s23, 0
      %p191 = por %p189, %p190
      %s192 = ssub.s32 %s17, %s24
      %p193 = scmp.eq.s32.totalorder %s192, 0
      %s195 = sadd.s32 %s194, 1
      %s196 = scalar_select %p193, %s194, %s195
      %p199 = pneg %p193
      %p200 = scmp.eq.s32.totalorder %s17, 1
      %p201 = por %p199, %p200
      %p202 = scmp.ne.s32.totalorder %s194, %s197
      %p203 = scmp.eq.s32.totalorder %s17, 0
      %p204 = por %p202, %p203
      %p205 = scmp.ne.s32.totalorder %s194, %s197
      %p206 = scmp.eq.s32.totalorder %s22, 1
      %p207 = por %p205, %p206
      %p208 = scmp.ne.s32.totalorder %s197, %s198
      %p209 = scmp.eq.s32.totalorder %s22, 0
      %p210 = por %p208, %p209
      %p211 = scmp.ne.s32.totalorder %s197, %s198
      %p212 = scmp.eq.s32.totalorder %s23, 1
      %p213 = por %p211, %p212
      %p215 = scmp.ne.s32.totalorder %s198, %s214
      %p216 = scmp.eq.s32.totalorder %s23, 0
      %p217 = por %p215, %p216
      %s219 = sadd.s32 %s218, 1
      %p222 = scmp.eq.s32.totalorder %s17, 1
      %p223 = scmp.ne.s32.totalorder %s218, %s220
      %p224 = scmp.eq.s32.totalorder %s17, 0
      %p225 = por %p223, %p224
      %p226 = scmp.ne.s32.totalorder %s218, %s220
      %p227 = scmp.eq.s32.totalorder %s22, 1
      %p228 = por %p226, %p227
      %p229 = scmp.ne.s32.totalorder %s220, %s221
      %p230 = scmp.eq.s32.totalorder %s22, 0
      %p231 = por %p229, %p230
      %p232 = scmp.ne.s32.totalorder %s220, %s221
      %p233 = scmp.eq.s32.totalorder %s23, 1
      %p234 = por %p232, %p233
      %p236 = scmp.ne.s32.totalorder %s221, %s235
      %p237 = scmp.eq.s32.totalorder %s23, 0
      %p238 = por %p236, %p237
      %s240 = sadd.s32 %s239, 1
      %p243 = scmp.eq.s32.totalorder %s17, 1
      %p244 = scmp.ne.s32.totalorder %s239, %s241
      %p245 = scmp.eq.s32.totalorder %s17, 0
      %p246 = por %p244, %p245
      %p247 = scmp.ne.s32.totalorder %s239, %s241
      %p248 = scmp.eq.s32.totalorder %s22, 1
      %p249 = por %p247, %p248
      %p250 = scmp.ne.s32.totalorder %s241, %s242
      %p251 = scmp.eq.s32.totalorder %s22, 0
      %p252 = por %p250, %p251
      %p253 = scmp.ne.s32.totalorder %s241, %s242
      %p254 = scmp.eq.s32.totalorder %s23, 1
      %p255 = por %p253, %p254
      %p257 = scmp.ne.s32.totalorder %s242, %s256
      %p258 = scmp.eq.s32.totalorder %s23, 0
      %p259 = por %p257, %p258
      %s261 = sadd.s32 %s260, 1
      %p264 = scmp.eq.s32.totalorder %s17, 1
      %p265 = scmp.ne.s32.totalorder %s260, %s262
      %p266 = scmp.eq.s32.totalorder %s17, 0
      %p267 = por %p265, %p266
      %p268 = scmp.ne.s32.totalorder %s260, %s262
      %p269 = scmp.eq.s32.totalorder %s22, 1
      %p270 = por %p268, %p269
      %p271 = scmp.ne.s32.totalorder %s262, %s263
      %p272 = scmp.eq.s32.totalorder %s22, 0
      %p273 = por %p271, %p272
      %p274 = scmp.ne.s32.totalorder %s262, %s263
      %p275 = scmp.eq.s32.totalorder %s23, 1
      %p276 = por %p274, %p275
      %p278 = scmp.ne.s32.totalorder %s263, %s277
      %p279 = scmp.eq.s32.totalorder %s23, 0
      %p280 = por %p278, %p279
      %p281 = scmp.le.s32.totalorder 1, %s17
      %p282 = scmp.lt.s32.totalorder %s17, 3
      %p283 = pnand %p281, %p282
      %p284 = pneg %p283
      // Predicated region
      $region9: #{roberta_pooled.1} parent=5 // pred_check
        _
      $region10: #{roberta_pooled.1} parent=5 // pred_check_branch
        %286 = sbr.rel (%p283) target = $region12
      $region11: #{roberta_pooled.1} parent=5 // pred_region
        %s287 = ssub.s32 %s17, 1
        // Predicated region
        $region13: #{roberta_pooled.1} parent=11 // pred_check
          %p288 = pneg %p38
        $region14: #{roberta_pooled.1} parent=11 // pred_check_branch
          %290 = sbr.rel (%p288) target = $region16
        $region15: #{roberta_pooled.1} parent=11 // pred_region
          _
        $region16: #{roberta_pooled.1} parent=11 // pred_fallthru
          _
        // Predicated region
        $region17: #{roberta_pooled.1} parent=11 // pred_check
          %p291 = pneg %p59
        $region18: #{roberta_pooled.1} parent=11 // pred_check_branch
          %293 = sbr.rel (%p291) target = $region20
        $region19: #{roberta_pooled.1} parent=11 // pred_region
          _
        $region20: #{roberta_pooled.1} parent=11 // pred_fallthru
          _
        // Predicated region
        $region21: #{roberta_pooled.1} parent=11 // pred_check
          %p294 = pneg %p80
        $region22: #{roberta_pooled.1} parent=11 // pred_check_branch
          %296 = sbr.rel (%p294) target = $region24
        $region23: #{roberta_pooled.1} parent=11 // pred_region
          _
        $region24: #{roberta_pooled.1} parent=11 // pred_fallthru
          _
        // Predicated region
        $region25: #{roberta_pooled.1} parent=11 // pred_check
          %p297 = pneg %p231
        $region26: #{roberta_pooled.1} parent=11 // pred_check_branch
          %299 = sbr.rel (%p297) target = $region28
        $region27: #{roberta_pooled.1} parent=11 // pred_region
          _
        $region28: #{roberta_pooled.1} parent=11 // pred_fallthru
          _
        // Predicated region
        $region29: #{roberta_pooled.1} parent=11 // pred_check
          %p300 = pneg %p252
        $region30: #{roberta_pooled.1} parent=11 // pred_check_branch
          %302 = sbr.rel (%p300) target = $region32
        $region31: #{roberta_pooled.1} parent=11 // pred_region
          _
        $region32: #{roberta_pooled.1} parent=11 // pred_fallthru
          _
      $region12: #{roberta_pooled.1} parent=5 // pred_fallthru
        _
      %p303 = scmp.lt.s32.totalorder %s17, 2
      // Predicated region
      $region33: #{roberta_pooled.1} parent=5 // pred_check
        %p304 = pneg %p303
      $region34: #{roberta_pooled.1} parent=5 // pred_check_branch
        %306 = sbr.rel (%p304) target = $region36
      $region35: #{roberta_pooled.1} parent=5 // pred_region
        // Predicated region
        $region37: #{roberta_pooled.1} parent=35 // pred_check
          %p307 = pneg %p100
        $region38: #{roberta_pooled.1} parent=35 // pred_check_branch
          %309 = sbr.rel (%p307) target = $region40
        $region39: #{roberta_pooled.1} parent=35 // pred_region
          %p310 = scmp.lt.s32.totalorder %s17, 1
          %s311 = scalar_select %p310, %s17, 1
          %s312 = smul.addr %s311, 4
          %s313 = smul.addr %s312, 4
          %s314 = scalar_lea.vmem %s3, %s313
        $region40: #{roberta_pooled.1} parent=35 // pred_fallthru
          _
        // Predicated region
        $region41: #{roberta_pooled.1} parent=35 // pred_check
          %p315 = pneg %p126
        $region42: #{roberta_pooled.1} parent=35 // pred_check_branch
          %317 = sbr.rel (%p315) target = $region44
        $region43: #{roberta_pooled.1} parent=35 // pred_region
          %p318 = scmp.lt.s32.totalorder %s17, 1
          %s319 = scalar_select %p318, %s17, 1
          %s320 = smul.addr %s319, 4
          %s321 = smul.addr %s320, 4
          %s322 = scalar_lea.vmem %s4, %s321
        $region44: #{roberta_pooled.1} parent=35 // pred_fallthru
          _
        // Predicated region
        $region45: #{roberta_pooled.1} parent=35 // pred_check
          %p323 = pneg %p152
        $region46: #{roberta_pooled.1} parent=35 // pred_check_branch
          %325 = sbr.rel (%p323) target = $region48
        $region47: #{roberta_pooled.1} parent=35 // pred_region
          %p326 = scmp.lt.s32.totalorder %s17, 1
          %s327 = scalar_select %p326, %s17, 1
          %s328 = smul.addr %s327, 4
          %s329 = smul.addr %s328, 4
          %s330 = scalar_lea.vmem %s5, %s329
        $region48: #{roberta_pooled.1} parent=35 // pred_fallthru
          _
        // Predicated region
        $region49: #{roberta_pooled.1} parent=35 // pred_check
          %p331 = pneg %p178
        $region50: #{roberta_pooled.1} parent=35 // pred_check_branch
          %333 = sbr.rel (%p331) target = $region52
        $region51: #{roberta_pooled.1} parent=35 // pred_region
          %p334 = scmp.lt.s32.totalorder %s17, 1
          %s335 = scalar_select %p334, %s17, 1
          %s336 = smul.addr %s335, 8
          %s337 = smul.addr %s336, 4
          %s338 = scalar_lea.vmem %s6, %s337
        $region52: #{roberta_pooled.1} parent=35 // pred_fallthru
          _
        // Predicated region
        $region53: #{roberta_pooled.1} parent=35 // pred_check
          %p339 = pneg %p204
        $region54: #{roberta_pooled.1} parent=35 // pred_check_branch
          %341 = sbr.rel (%p339) target = $region56
        $region55: #{roberta_pooled.1} parent=35 // pred_region
          %p342 = scmp.lt.s32.totalorder %s17, 1
          %s343 = scalar_select %p342, %s17, 1
          %s344 = smul.addr %s343, 8
          %s345 = scalar_lea.vmem %s7, %s344
        $region56: #{roberta_pooled.1} parent=35 // pred_fallthru
          _
      $region36: #{roberta_pooled.1} parent=5 // pred_fallthru
        _
      %p346 = scmp.le.s32.totalorder 1, %s17
      %p347 = scmp.lt.s32.totalorder %s17, 3
      %p348 = pnand %p346, %p347
      %p349 = pneg %p348
      // Predicated region
      $region57: #{roberta_pooled.1} parent=5 // pred_check
        _
      $region58: #{roberta_pooled.1} parent=5 // pred_check_branch
        %351 = sbr.rel (%p348) target = $region60
      $region59: #{roberta_pooled.1} parent=5 // pred_region
        %s352 = ssub.s32 %s17, 1
        %p353 = pneg %p38
        %p354 = pneg %p35
        %p355 = pneg %p59
        %p356 = pneg %p56
        %p357 = pneg %p80
        %p358 = pneg %p77
        %p359 = scmp.lt.s32.totalorder %s22, 1
        %s360 = scalar_select %p359, %s22, 1
        %s361 = smul.addr %s360, 4
        %s362 = smul.addr %s361, 4
        %s363 = scalar_lea.vmem %s3, %s362
        %p364 = pneg %p106
        %p365 = pneg %p103
        %p366 = scmp.lt.s32.totalorder %s22, 1
        %s367 = scalar_select %p366, %s22, 1
        %s368 = smul.addr %s367, 4
        %s369 = smul.addr %s368, 4
        %s370 = scalar_lea.vmem %s4, %s369
        %p371 = pneg %p132
        %p372 = pneg %p129
        %p373 = scmp.lt.s32.totalorder %s22, 1
        %s374 = scalar_select %p373, %s22, 1
        %s375 = smul.addr %s374, 4
        %s376 = smul.addr %s375, 4
        %s377 = scalar_lea.vmem %s5, %s376
        %p378 = pneg %p158
        %p379 = pneg %p155
        %p380 = scmp.lt.s32.totalorder %s22, 1
        %s381 = scalar_select %p380, %s22, 1
        %s382 = smul.addr %s381, 8
        %s383 = smul.addr %s382, 4
        %s384 = scalar_lea.vmem %s6, %s383
        %p385 = pneg %p184
        %p386 = pneg %p181
        %p387 = scmp.lt.s32.totalorder %s22, 1
        %s388 = scalar_select %p387, %s22, 1
        %s389 = smul.addr %s388, 8
        %s390 = scalar_lea.vmem %s7, %s389
        %p391 = pneg %p210
        %p392 = pneg %p207
        %p393 = pneg %p231
        %p394 = pneg %p228
        %p395 = pneg %p252
        %p396 = pneg %p249
        %p397 = pneg %p273
        %p398 = pneg %p270
        %p399 = scmp.lt.s32.totalorder %s22, 1
        %s400 = scalar_select %p399, %s22, 1
        %s401 = smul.addr %s400, 4
        %s402 = smul.addr %s401, 4
        %s403 = scalar_lea.vmem %s3, %s402
        %p404 = scmp.lt.s32.totalorder %s22, 1
        %s405 = scalar_select %p404, %s22, 1
        %s406 = smul.addr %s405, 4
        %s407 = smul.addr %s406, 4
        %s408 = scalar_lea.vmem %s4, %s407
        %p409 = scmp.lt.s32.totalorder %s22, 1
        %s410 = scalar_select %p409, %s22, 1
        %s411 = smul.addr %s410, 4
        %s412 = smul.addr %s411, 4
        %s413 = scalar_lea.vmem %s5, %s412
        %p414 = scmp.lt.s32.totalorder %s22, 1
        %s415 = scalar_select %p414, %s22, 1
        %s416 = smul.addr %s415, 8
        %s417 = smul.addr %s416, 4
        %s418 = scalar_lea.vmem %s6, %s417
        %p419 = scmp.lt.s32.totalorder %s22, 1
        %s420 = scalar_select %p419, %s22, 1
        %s421 = smul.addr %s420, 8
        %s422 = scalar_lea.vmem %s7, %s421
        %p424 = scmp.eq.s32.totalorder %s22, 0
        // Predicated region
        $region61: #{roberta_pooled.1} parent=59 // pred_check
          %p425 = pneg %p424
        $region62: #{roberta_pooled.1} parent=59 // pred_check_branch
          %427 = sbr.rel (%p425) target = $region64
        $region63: #{roberta_pooled.1} parent=59 // pred_region
          %v428 = vld [vmem:[%s0] sm:$0xff]
          %v429 = vld [vmem:[%s0 + $0x8] sm:$0xff]
          %v430 = vld [vmem:[%s2] sm:$0x1]
          %v431 = vld [vmem:[%s2 + $0x1] sm:$0x1]
          %vm432 = vcmask 261120
          %v433 = vsel %vm432, %v428, 0.0
          %434 = vadd.xlane.f32.xlu0 %v433
          %v435 = vpop.xlane.xlu0 %434
          %v436 = vsel %vm432, %v429, 0.0
          %437 = vadd.xlane.f32.xlu0 %v436
          %v438 = vpop.xlane.xlu0 %437
          %v439 = vrcp.pop 32.0
          %v440 = vmul.f32 %v435, %v439
          %v441 = vmul.f32 %v438, %v439
          %v442 = vsub.f32 %v428, %v440
          %v443 = vsub.f32 %v429, %v441
          %v444 = vmul.f32 %v442, %v442
          %v445 = vmul.f32 %v443, %v443
          %v446 = vsel %vm432, %v444, 0.0
          %447 = vadd.xlane.f32.xlu0 %v446
          %v448 = vpop.xlane.xlu0 %447
          %v449 = vsel %vm432, %v445, 0.0
          %450 = vadd.xlane.f32.xlu0 %v449
          %v451 = vpop.xlane.xlu0 %450
          %v452 = vmul.f32 %v448, %v439
          %v453 = vmul.f32 %v451, %v439
          %v454 = vadd.f32 %v452, 1e-05
          %v455 = vadd.f32 %v453, 1e-05
          %v456 = vrsqrt.pop %v454
          %v457 = vrsqrt.pop %v455
          %v458 = vmul.f32 %v442, %v456
          %v459 = vmul.f32 %v443, %v457
          %v460 = vlaneseq
          %v461 = vshrl.u32 %v460, 7
          %v462 = vsub.s32 0, %v461
          %v463 = vrot.slane %v430, %v462
          %v464 = vmul.f32 %v458, %v463
          %v465 = vmul.f32 %v459, %v463
          %v466 = vlaneseq
          %v467 = vshrl.u32 %v466, 7
          %v468 = vsub.s32 0, %v467
          %v469 = vrot.slane %v431, %v468
          %v470 = vadd.f32 %v464, %v469
          %v471 = vadd.f32 %v465, %v469
          %472 = vst.msk [vmem:[#allocation2] sm:$0xff] %vm432, %v470
          %473 = vst.msk [vmem:[#allocation2 + $0x8] sm:$0xff] %vm432, %v471
        $region64: #{roberta_pooled.1} parent=59 // pred_fallthru
          _
        %v474 = vld [vmem:[#allocation2] sm:$0xff]
        %v475 = vld [vmem:[#allocation2 + $0x8] sm:$0xff]
        %v476 = vld [vmem:[%s422] sm:$0xff]
        %v477 = vld [vmem:[%s1] sm:$0x1]
        %v478 = vld [vmem:[%s1 + $0x1] sm:$0x1]
        %v481 = vlaneseq
        %v482 = vshrl.u32 %v481, 7
        %v483 = vsub.s32 0, %v482
        %v484 = vrot.slane %v477, %v483
        %v485 = vlaneseq
        %v486 = vshrl.u32 %v485, 7
        %v487 = vsub.s32 0, %v486
        %v488 = vrot.slane %v478, %v487
        %v491 = vpack.c.bf16 %v475, %v474
        %v492 = vld [vmem:[%s403] sm:$0xf]
        %v493 = vld [vmem:[%s403 + $0x4] sm:$0xf]
        %v494 = vld [vmem:[%s403 + $0x8] sm:$0xf]
        %v495 = vld [vmem:[%s403 + $0xc] sm:$0xf]
        %v496 = vlaneseq
        %v497 = vshrl.u32 %v496, 7
        %v498 = vsub.s32 0, %v497
        %v499 = vrot.slane %v476, %v498
        %v504 = vunpack.c.l.b16 %v492
        %v505 = vunpack.c.l.b16 %v493
        %v506 = vunpack.c.l.b16 %v494
        %v507 = vunpack.c.l.b16 %v495
        %v508 = vpack.c.b16 %v505, %v504
        %v509 = vpack.c.b16 %v507, %v506
        %vm512 = vcmask 261120
        %v514 = vsel %vm512, %v491, 0
        %516 = vmatprep.subr.bf16.mxu0 0
        %517 = vmatpush1.bf16.msra.mxu0 %v508
        %518 = vmatprep.subr.bf16.mxu0 0
        %519 = vmatpush1.bf16.msra.mxu0 %v509
        %520 = vmatprep.subr.bf16.mxu0 0
        %521 = vmatpush1.bf16.msra.mxu0 0
        %522 = vmatprep.subr.bf16.mxu0 0
        %523 = vmatpush1.bf16.msra.mxu0 0
        %524 = vmatprep.subr.bf16.mxu0 0
        %525 = vmatpush1.bf16.msra.mxu0 0
        %526 = vmatprep.subr.bf16.mxu0 0
        %527 = vmatpush1.bf16.msra.mxu0 0
        %528 = vmatprep.subr.bf16.mxu0 0
        %529 = vmatpush1.bf16.msra.mxu0 0
        %530 = vmatprep.subr.bf16.mxu0 0
        %531 = vmatpush1.bf16.msra.mxu0 0
        %532 = vmatprep.subr.bf16.mxu0 0
        %533 = vmatpush1.bf16.msra.mxu0 0
        %534 = vmatprep.subr.bf16.mxu0 0
        %535 = vmatpush1.bf16.msra.mxu0 0
        %536 = vmatprep.subr.bf16.mxu0 0
        %537 = vmatpush1.bf16.msra.mxu0 0
        %538 = vmatprep.subr.bf16.mxu0 0
        %539 = vmatpush1.bf16.msra.mxu0 0
        %540 = vmatprep.subr.bf16.mxu0 0
        %541 = vmatpush1.bf16.msra.mxu0 0
        %542 = vmatprep.subr.bf16.mxu0 0
        %543 = vmatpush1.bf16.msra.mxu0 0
        %544 = vmatprep.subr.bf16.mxu0 0
        %545 = vmatpush1.bf16.msra.mxu0 0
        %546 = vmatprep.subr.bf16.mxu0 0
        %547 = vmatpush1.bf16.msra.mxu0 0
        %548 = vmatprep.mubr.bf16.mxu0 0
        %549 = vmatmul.mubr.bf16.gmra.mrb[0].mxu0 %v514
        %v550 = vpop.f32.mrb[0].mxu0
        %v551 = vadd.f32 %v499, %v550
        %v552 = vpop.f32.mrb[0].mxu0
        %v553 = vpop.f32.mrb[0].mxu0
        %v554 = vadd.f32 %v499, %v553
        %v555 = vpop.f32.mrb[0].mxu0
        %556 = vdwg.mxu0
        %v557 = vmul.f32 %v551, 0.25
        %v558 = vmul.f32 %v554, 0.25
        %v559 = vpack.c.bf16 %v558, %v557
        %v561 = vunpack.c.l.b16 %v559
        %v562 = vunpack.c.h.b16 %v559
        %v563 = vpack.c.b16 %v561, %v561
        %v564 = vpack.c.b16 %v562, %v562
        %v565 = vpack.c.bf16 %v554, %v551
        %v567 = vunpack.c.l.b16 %v565
        %v568 = vunpack.c.h.b16 %v565
        %v569 = vpack.c.b16 %v567, %v567
        %570 = vrot.lane.b32.xlu0 %v569, 96
        %v571 = vpop.permute.xlu0 %570
        %vm572 = vcmask 130048
        %v574 = vsel %vm572, %v563, 0
        %v577 = vsel %vm572, %v571, 0
        %579 = vmatprep.subr.bf16.mxu0 0
        %580 = vmatpush1.bf16.xpose.msra.mxu0 %v577
        %581 = vmatprep.subr.bf16.mxu0 0
        %582 = vmatpush1.bf16.xpose.msra.mxu0 0
        %583 = vmatprep.subr.bf16.mxu0 0
        %584 = vmatpush1.bf16.xpose.msra.mxu0 0
        %585 = vmatprep.subr.bf16.mxu0 0
        %586 = vmatpush1.bf16.xpose.msra.mxu0 0
        %587 = vmatprep.subr.bf16.mxu0 0
        %588 = vmatpush1.bf16.xpose.msra.mxu0 0
        %589 = vmatprep.subr.bf16.mxu0 0
        %590 = vmatpush1.bf16.xpose.msra.mxu0 0
        %591 = vmatprep.subr.bf16.mxu0 0
        %592 = vmatpush1.bf16.xpose.msra.mxu0 0
        %593 = vmatprep.subr.bf16.mxu0 0
        %594 = vmatpush1.bf16.xpose.msra.mxu0 0
        %595 = vmatprep.subr.bf16.mxu0 0
        %596 = vmatpush1.bf16.xpose.msra.mxu0 0
        %597 = vmatprep.subr.bf16.mxu0 0
        %598 = vmatpush1.bf16.xpose.msra.mxu0 0
        %599 = vmatprep.subr.bf16.mxu0 0
        %600 = vmatpush1.bf16.xpose.msra.mxu0 0
        %601 = vmatprep.subr.bf16.mxu0 0
        %602 = vmatpush1.bf16.xpose.msra.mxu0 0
        %603 = vmatprep.subr.bf16.mxu0 0
        %604 = vmatpush1.bf16.xpose.msra.mxu0 0
        %605 = vmatprep.subr.bf16.mxu0 0
        %606 = vmatpush1.bf16.xpose.msra.mxu0 0
        %607 = vmatprep.subr.bf16.mxu0 0
        %608 = vmatpush1.bf16.xpose.msra.mxu0 0
        %609 = vmatprep.subr.bf16.mxu0 0
        %610 = vmatpush1.bf16.xpose.msra.mxu0 0
        %611 = vmatprep.mubr.bf16.mxu0 0
        %612 = vmatmul.mubr.bf16.gmra.mrb[0].mxu0 %v574
        %v613 = vpop.f32.mrb[0].mxu0
        %v614 = vadd.f32 %v484, %v613
        %v615 = vpop.f32.mrb[0].mxu0
        %v616 = vpop.f32.mrb[0].mxu0
        %v617 = vpop.f32.mrb[0].mxu0
        %618 = vdwg.mxu0
        %v619 = vpack.c.b16 %v568, %v568
        %620 = vrot.lane.b32.xlu0 %v619, 96
        %v621 = vpop.permute.xlu0 %620
        %v623 = vsel %vm572, %v564, 0
        %v626 = vsel %vm572, %v621, 0
        %628 = vmatprep.subr.bf16.mxu0 0
        %629 = vmatpush1.bf16.xpose.msra.mxu0 %v626
        %630 = vmatprep.subr.bf16.mxu0 0
        %631 = vmatpush1.bf16.xpose.msra.mxu0 0
        %632 = vmatprep.subr.bf16.mxu0 0
        %633 = vmatpush1.bf16.xpose.msra.mxu0 0
        %634 = vmatprep.subr.bf16.mxu0 0
        %635 = vmatpush1.bf16.xpose.msra.mxu0 0
        %636 = vmatprep.subr.bf16.mxu0 0
        %637 = vmatpush1.bf16.xpose.msra.mxu0 0
        %638 = vmatprep.subr.bf16.mxu0 0
        %639 = vmatpush1.bf16.xpose.msra.mxu0 0
        %640 = vmatprep.subr.bf16.mxu0 0
        %641 = vmatpush1.bf16.xpose.msra.mxu0 0
        %642 = vmatprep.subr.bf16.mxu0 0
        %643 = vmatpush1.bf16.xpose.msra.mxu0 0
        %644 = vmatprep.subr.bf16.mxu0 0
        %645 = vmatpush1.bf16.xpose.msra.mxu0 0
        %646 = vmatprep.subr.bf16.mxu0 0
        %647 = vmatpush1.bf16.xpose.msra.mxu0 0
        %648 = vmatprep.subr.bf16.mxu0 0
        %649 = vmatpush1.bf16.xpose.msra.mxu0 0
        %650 = vmatprep.subr.bf16.mxu0 0
        %651 = vmatpush1.bf16.xpose.msra.mxu0 0
        %652 = vmatprep.subr.bf16.mxu0 0
        %653 = vmatpush1.bf16.xpose.msra.mxu0 0
        %654 = vmatprep.subr.bf16.mxu0 0
        %655 = vmatpush1.bf16.xpose.msra.mxu0 0
        %656 = vmatprep.subr.bf16.mxu0 0
        %657 = vmatpush1.bf16.xpose.msra.mxu0 0
        %658 = vmatprep.subr.bf16.mxu0 0
        %659 = vmatpush1.bf16.xpose.msra.mxu0 0
        %660 = vmatprep.mubr.bf16.mxu0 0
        %661 = vmatmul.mubr.bf16.gmra.mrb[0].mxu0 %v623
        %v662 = vpop.f32.mrb[0].mxu0
        %v663 = vadd.f32 %v488, %v662
        %v664 = vpop.f32.mrb[0].mxu0
        %v665 = vpop.f32.mrb[0].mxu0
        %v666 = vpop.f32.mrb[0].mxu0
        %667 = vdwg.mxu0
        %vm668 = vcmask 64512
        %v669 = vsel %vm668, %v614, -inf
        %670 = vmax.xlane.f32.xlu0 %v669
        %v671 = vpop.xlane.xlu0 %670
        %v672 = vsel %vm668, %v663, -inf
        %673 = vmax.xlane.f32.xlu0 %v672
        %v674 = vpop.xlane.xlu0 %673
        %v675 = vsub.f32 %v614, %v671
        %v676 = vsub.f32 %v663, %v674
        %v677 = vmul.f32 %v675, 1.442695
        %v678 = vpow.pop %v677
        %v679 = vmul.f32 %v676, 1.442695
        %v680 = vpow.pop %v679
        %v681 = vsel %vm668, %v678, 0.0
        %682 = vadd.xlane.f32.xlu0 %v681
        %v683 = vpop.xlane.xlu0 %682
        %v684 = vsel %vm668, %v680, 0.0
        %685 = vadd.xlane.f32.xlu0 %v684
        %v686 = vpop.xlane.xlu0 %685
        %v687 = vrcp.pop %v683
        %v688 = vrcp.pop %v686
        %v689 = vmul.f32 %v678, %v687
        %v690 = vmul.f32 %v680, %v688
        %v691 = vpack.c.bf16 %v689, %v689
        %v692 = vpack.c.bf16 %v690, %v690
        %693 = vrot.lane.b32.xlu0 %v569, 64
        %v694 = vpop.permute.xlu0 %693
        %v696 = vsel %vm668, %v691, 0
        %vm698 = vcmask 1043456
        %v700 = vsel %vm698, %v694, 0
        %702 = vmatprep.subr.bf16.mxu0 0
        %703 = vmatpush1.bf16.msra.mxu0 %v700
        %704 = vmatprep.subr.bf16.mxu0 0
        %705 = vmatpush1.bf16.msra.mxu0 0
        %706 = vmatprep.subr.bf16.mxu0 0
        %707 = vmatpush1.bf16.msra.mxu0 0
        %708 = vmatprep.subr.bf16.mxu0 0
        %709 = vmatpush1.bf16.msra.mxu0 0
        %710 = vmatprep.subr.bf16.mxu0 0
        %711 = vmatpush1.bf16.msra.mxu0 0
        %712 = vmatprep.subr.bf16.mxu0 0
        %713 = vmatpush1.bf16.msra.mxu0 0
        %714 = vmatprep.subr.bf16.mxu0 0
        %715 = vmatpush1.bf16.msra.mxu0 0
        %716 = vmatprep.subr.bf16.mxu0 0
        %717 = vmatpush1.bf16.msra.mxu0 0
        %718 = vmatprep.subr.bf16.mxu0 0
        %719 = vmatpush1.bf16.msra.mxu0 0
        %720 = vmatprep.subr.bf16.mxu0 0
        %721 = vmatpush1.bf16.msra.mxu0 0
        %722 = vmatprep.subr.bf16.mxu0 0
        %723 = vmatpush1.bf16.msra.mxu0 0
        %724 = vmatprep.subr.bf16.mxu0 0
        %725 = vmatpush1.bf16.msra.mxu0 0
        %726 = vmatprep.subr.bf16.mxu0 0
        %727 = vmatpush1.bf16.msra.mxu0 0
        %728 = vmatprep.subr.bf16.mxu0 0
        %729 = vmatpush1.bf16.msra.mxu0 0
        %730 = vmatprep.subr.bf16.mxu0 0
        %731 = vmatpush1.bf16.msra.mxu0 0
        %732 = vmatprep.subr.bf16.mxu0 0
        %733 = vmatpush1.bf16.msra.mxu0 0
        %734 = vmatprep.mubr.bf16.mxu0 0
        %735 = vmatmul.mubr.bf16.gmra.mrb[0].mxu0 %v696
        %v736 = vpop.f32.mrb[0].mxu0
        %v737 = vadd.f32 0.0, %v736
        %v738 = vpop.f32.mrb[0].mxu0
        %v739 = vpop.f32.mrb[0].mxu0
        %v740 = vpop.f32.mrb[0].mxu0
        %741 = vdwg.mxu0
        %742 = vrot.lane.b32.xlu0 %v619, 64
        %v743 = vpop.permute.xlu0 %742
        %v745 = vsel %vm668, %v692, 0
        %v748 = vsel %vm698, %v743, 0
        %750 = vmatprep.subr.bf16.mxu0 0
        %751 = vmatpush1.bf16.msra.mxu0 %v748
        %752 = vmatprep.subr.bf16.mxu0 0
        %753 = vmatpush1.bf16.msra.mxu0 0
        %754 = vmatprep.subr.bf16.mxu0 0
        %755 = vmatpush1.bf16.msra.mxu0 0
        %756 = vmatprep.subr.bf16.mxu0 0
        %757 = vmatpush1.bf16.msra.mxu0 0
        %758 = vmatprep.subr.bf16.mxu0 0
        %759 = vmatpush1.bf16.msra.mxu0 0
        %760 = vmatprep.subr.bf16.mxu0 0
        %761 = vmatpush1.bf16.msra.mxu0 0
        %762 = vmatprep.subr.bf16.mxu0 0
        %763 = vmatpush1.bf16.msra.mxu0 0
        %764 = vmatprep.subr.bf16.mxu0 0
        %765 = vmatpush1.bf16.msra.mxu0 0
        %766 = vmatprep.subr.bf16.mxu0 0
        %767 = vmatpush1.bf16.msra.mxu0 0
        %768 = vmatprep.subr.bf16.mxu0 0
        %769 = vmatpush1.bf16.msra.mxu0 0
        %770 = vmatprep.subr.bf16.mxu0 0
        %771 = vmatpush1.bf16.msra.mxu0 0
        %772 = vmatprep.subr.bf16.mxu0 0
        %773 = vmatpush1.bf16.msra.mxu0 0
        %774 = vmatprep.subr.bf16.mxu0 0
        %775 = vmatpush1.bf16.msra.mxu0 0
        %776 = vmatprep.subr.bf16.mxu0 0
        %777 = vmatpush1.bf16.msra.mxu0 0
        %778 = vmatprep.subr.bf16.mxu0 0
        %779 = vmatpush1.bf16.msra.mxu0 0
        %780 = vmatprep.subr.bf16.mxu0 0
        %781 = vmatpush1.bf16.msra.mxu0 0
        %782 = vmatprep.mubr.bf16.mxu0 0
        %783 = vmatmul.mubr.bf16.gmra.mrb[0].mxu0 %v745
        %v784 = vpop.f32.mrb[0].mxu0
        %v785 = vadd.f32 0.0, %v784
        %v786 = vpop.f32.mrb[0].mxu0
        %v787 = vpop.f32.mrb[0].mxu0
        %v788 = vpop.f32.mrb[0].mxu0
        %789 = vdwg.mxu0
        %790 = vrot.lane.b32.xlu0 %v563, 112
        %v791 = vpop.permute.xlu0 %790
        %792 = vrot.lane.b32.xlu0 %v569, 80
        %v793 = vpop.permute.xlu0 %792
        %v795 = vsel %vm572, %v791, 0
        %v798 = vsel %vm572, %v793, 0
        %800 = vmatprep.subr.bf16.mxu0 0
        %801 = vmatpush1.bf16.xpose.msra.mxu0 %v798
        %802 = vmatprep.subr.bf16.mxu0 0
        %803 = vmatpush1.bf16.xpose.msra.mxu0 0
        %804 = vmatprep.subr.bf16.mxu0 0
        %805 = vmatpush1.bf16.xpose.msra.mxu0 0
        %806 = vmatprep.subr.bf16.mxu0 0
        %807 = vmatpush1.bf16.xpose.msra.mxu0 0
        %808 = vmatprep.subr.bf16.mxu0 0
        %809 = vmatpush1.bf16.xpose.msra.mxu0 0
        %810 = vmatprep.subr.bf16.mxu0 0
        %811 = vmatpush1.bf16.xpose.msra.mxu0 0
        %812 = vmatprep.subr.bf16.mxu0 0
        %813 = vmatpush1.bf16.xpose.msra.mxu0 0
        %814 = vmatprep.subr.bf16.mxu0 0
        %815 = vmatpush1.bf16.xpose.msra.mxu0 0
        %816 = vmatprep.subr.bf16.mxu0 0
        %817 = vmatpush1.bf16.xpose.msra.mxu0 0
        %818 = vmatprep.subr.bf16.mxu0 0
        %819 = vmatpush1.bf16.xpose.msra.mxu0 0
        %820 = vmatprep.subr.bf16.mxu0 0
        %821 = vmatpush1.bf16.xpose.msra.mxu0 0
        %822 = vmatprep.subr.bf16.mxu0 0
        %823 = vmatpush1.bf16.xpose.msra.mxu0 0
        %824 = vmatprep.subr.bf16.mxu0 0
        %825 = vmatpush1.bf16.xpose.msra.mxu0 0
        %826 = vmatprep.subr.bf16.mxu0 0
        %827 = vmatpush1.bf16.xpose.msra.mxu0 0
        %828 = vmatprep.subr.bf16.mxu0 0
        %829 = vmatpush1.bf16.xpose.msra.mxu0 0
        %830 = vmatprep.subr.bf16.mxu0 0
        %831 = vmatpush1.bf16.xpose.msra.mxu0 0
        %832 = vmatprep.mubr.bf16.mxu0 0
        %833 = vmatmul.mubr.bf16.gmra.mrb[0].mxu0 %v795
        %v834 = vpop.f32.mrb[0].mxu0
        %v835 = vadd.f32 %v484, %v834
        %v836 = vpop.f32.mrb[0].mxu0
        %v837 = vpop.f32.mrb[0].mxu0
        %v838 = vpop.f32.mrb[0].mxu0
        %839 = vdwg.mxu0
        %840 = vrot.lane.b32.xlu0 %v564, 112
        %v841 = vpop.permute.xlu0 %840
        %842 = vrot.lane.b32.xlu0 %v619, 80
        %v843 = vpop.permute.xlu0 %842
        %v845 = vsel %vm572, %v841, 0
        %v848 = vsel %vm572, %v843, 0
        %850 = vmatprep.subr.bf16.mxu0 0
        %851 = vmatpush1.bf16.xpose.msra.mxu0 %v848
        %852 = vmatprep.subr.bf16.mxu0 0
        %853 = vmatpush1.bf16.xpose.msra.mxu0 0
        %854 = vmatprep.subr.bf16.mxu0 0
        %855 = vmatpush1.bf16.xpose.msra.mxu0 0
        %856 = vmatprep.subr.bf16.mxu0 0
        %857 = vmatpush1.bf16.xpose.msra.mxu0 0
        %858 = vmatprep.subr.bf16.mxu0 0
        %859 = vmatpush1.bf16.xpose.msra.mxu0 0
        %860 = vmatprep.subr.bf16.mxu0 0
        %861 = vmatpush1.bf16.xpose.msra.mxu0 0
        %862 = vmatprep.subr.bf16.mxu0 0
        %863 = vmatpush1.bf16.xpose.msra.mxu0 0
        %864 = vmatprep.subr.bf16.mxu0 0
        %865 = vmatpush1.bf16.xpose.msra.mxu0 0
        %866 = vmatprep.subr.bf16.mxu0 0
        %867 = vmatpush1.bf16.xpose.msra.mxu0 0
        %868 = vmatprep.subr.bf16.mxu0 0
        %869 = vmatpush1.bf16.xpose.msra.mxu0 0
        %870 = vmatprep.subr.bf16.mxu0 0
        %871 = vmatpush1.bf16.xpose.msra.mxu0 0
        %872 = vmatprep.subr.bf16.mxu0 0
        %873 = vmatpush1.bf16.xpose.msra.mxu0 0
        %874 = vmatprep.subr.bf16.mxu0 0
        %875 = vmatpush1.bf16.xpose.msra.mxu0 0
        %876 = vmatprep.subr.bf16.mxu0 0
        %877 = vmatpush1.bf16.xpose.msra.mxu0 0
        %878 = vmatprep.subr.bf16.mxu0 0
        %879 = vmatpush1.bf16.xpose.msra.mxu0 0
        %880 = vmatprep.subr.bf16.mxu0 0
        %881 = vmatpush1.bf16.xpose.msra.mxu0 0
        %882 = vmatprep.mubr.bf16.mxu0 0
        %883 = vmatmul.mubr.bf16.gmra.mrb[0].mxu0 %v845
        %v884 = vpop.f32.mrb[0].mxu0
        %v885 = vadd.f32 %v488, %v884
        %v886 = vpop.f32.mrb[0].mxu0
        %v887 = vpop.f32.mrb[0].mxu0
        %v888 = vpop.f32.mrb[0].mxu0
        %889 = vdwg.mxu0
        %v890 = vsel %vm668, %v835, -inf
        %891 = vmax.xlane.f32.xlu0 %v890
        %v892 = vpop.xlane.xlu0 %891
        %v893 = vsel %vm668, %v885, -inf
        %894 = vmax.xlane.f32.xlu0 %v893
        %v895 = vpop.xlane.xlu0 %894
        %v896 = vsub.f32 %v835, %v892
        %v897 = vsub.f32 %v885, %v895
        %v898 = vmul.f32 %v896, 1.442695
        %v899 = vpow.pop %v898
        %v900 = vmul.f32 %v897, 1.442695
        %v901 = vpow.pop %v900
        %v902 = vsel %vm668, %v899, 0.0
        %903 = vadd.xlane.f32.xlu0 %v902
        %v904 = vpop.xlane.xlu0 %903
        %v905 = vsel %vm668, %v901, 0.0
        %906 = vadd.xlane.f32.xlu0 %v905
        %v907 = vpop.xlane.xlu0 %906
        %v908 = vrcp.pop %v904
        %v909 = vrcp.pop %v907
        %v910 = vmul.f32 %v899, %v908
        %v911 = vmul.f32 %v901, %v909
        %v912 = vpack.c.bf16 %v910, %v910
        %v913 = vpack.c.bf16 %v911, %v911
        %914 = vrot.lane.b32.xlu0 %v569, 48
        %v915 = vpop.permute.xlu0 %914
        %v917 = vsel %vm668, %v912, 0
        %v920 = vsel %vm698, %v915, 0
        %922 = vmatprep.subr.bf16.mxu0 0
        %923 = vmatpush1.bf16.msra.mxu0 %v920
        %924 = vmatprep.subr.bf16.mxu0 0
        %925 = vmatpush1.bf16.msra.mxu0 0
        %926 = vmatprep.subr.bf16.mxu0 0
        %927 = vmatpush1.bf16.msra.mxu0 0
        %928 = vmatprep.subr.bf16.mxu0 0
        %929 = vmatpush1.bf16.msra.mxu0 0
        %930 = vmatprep.subr.bf16.mxu0 0
        %931 = vmatpush1.bf16.msra.mxu0 0
        %932 = vmatprep.subr.bf16.mxu0 0
        %933 = vmatpush1.bf16.msra.mxu0 0
        %934 = vmatprep.subr.bf16.mxu0 0
        %935 = vmatpush1.bf16.msra.mxu0 0
        %936 = vmatprep.subr.bf16.mxu0 0
        %937 = vmatpush1.bf16.msra.mxu0 0
        %938 = vmatprep.subr.bf16.mxu0 0
        %939 = vmatpush1.bf16.msra.mxu0 0
        %940 = vmatprep.subr.bf16.mxu0 0
        %941 = vmatpush1.bf16.msra.mxu0 0
        %942 = vmatprep.subr.bf16.mxu0 0
        %943 = vmatpush1.bf16.msra.mxu0 0
        %944 = vmatprep.subr.bf16.mxu0 0
        %945 = vmatpush1.bf16.msra.mxu0 0
        %946 = vmatprep.subr.bf16.mxu0 0
        %947 = vmatpush1.bf16.msra.mxu0 0
        %948 = vmatprep.subr.bf16.mxu0 0
        %949 = vmatpush1.bf16.msra.mxu0 0
        %950 = vmatprep.subr.bf16.mxu0 0
        %951 = vmatpush1.bf16.msra.mxu0 0
        %952 = vmatprep.subr.bf16.mxu0 0
        %953 = vmatpush1.bf16.msra.mxu0 0
        %954 = vmatprep.mubr.bf16.mxu0 0
        %955 = vmatmul.mubr.bf16.gmra.mrb[0].mxu0 %v917
        %v956 = vpop.f32.mrb[0].mxu0
        %v957 = vadd.f32 0.0, %v956
        %v958 = vpop.f32.mrb[0].mxu0
        %v959 = vpop.f32.mrb[0].mxu0
        %v960 = vpop.f32.mrb[0].mxu0
        %961 = vdwg.mxu0
        %962 = vrot.lane.b32.xlu0 %v619, 48
        %v963 = vpop.permute.xlu0 %962
        %v965 = vsel %vm668, %v913, 0
        %v968 = vsel %vm698, %v963, 0
        %970 = vmatprep.subr.bf16.mxu0 0
        %971 = vmatpush1.bf16.msra.mxu0 %v968
        %972 = vmatprep.subr.bf16.mxu0 0
        %973 = vmatpush1.bf16.msra.mxu0 0
        %974 = vmatprep.subr.bf16.mxu0 0
        %975 = vmatpush1.bf16.msra.mxu0 0
        %976 = vmatprep.subr.bf16.mxu0 0
        %977 = vmatpush1.bf16.msra.mxu0 0
        %978 = vmatprep.subr.bf16.mxu0 0
        %979 = vmatpush1.bf16.msra.mxu0 0
        %980 = vmatprep.subr.bf16.mxu0 0
        %981 = vmatpush1.bf16.msra.mxu0 0
        %982 = vmatprep.subr.bf16.mxu0 0
        %983 = vmatpush1.bf16.msra.mxu0 0
        %984 = vmatprep.subr.bf16.mxu0 0
        %985 = vmatpush1.bf16.msra.mxu0 0
        %986 = vmatprep.subr.bf16.mxu0 0
        %987 = vmatpush1.bf16.msra.mxu0 0
        %988 = vmatprep.subr.bf16.mxu0 0
        %989 = vmatpush1.bf16.msra.mxu0 0
        %990 = vmatprep.subr.bf16.mxu0 0
        %991 = vmatpush1.bf16.msra.mxu0 0
        %992 = vmatprep.subr.bf16.mxu0 0
        %993 = vmatpush1.bf16.msra.mxu0 0
        %994 = vmatprep.subr.bf16.mxu0 0
        %995 = vmatpush1.bf16.msra.mxu0 0
        %996 = vmatprep.subr.bf16.mxu0 0
        %997 = vmatpush1.bf16.msra.mxu0 0
        %998 = vmatprep.subr.bf16.mxu0 0
        %999 = vmatpush1.bf16.msra.mxu0 0
        %1000 = vmatprep.subr.bf16.mxu0 0
        %1001 = vmatpush1.bf16.msra.mxu0 0
        %1002 = vmatprep.mubr.bf16.mxu0 0
        %1003 = vmatmul.mubr.bf16.gmra.mrb[0].mxu0 %v965
        %v1004 = vpop.f32.mrb[0].mxu0
        %v1005 = vadd.f32 0.0, %v1004
        %v1006 = vpop.f32.mrb[0].mxu0
        %v1007 = vpop.f32.mrb[0].mxu0
        %v1008 = vpop.f32.mrb[0].mxu0
        %1009 = vdwg.mxu0
        %1012 = vrot.lane.b32.xlu0 %v957, 16
        %v1013 = vpop.permute.xlu0 %1012
        %1014 = vrot.lane.b32.xlu0 %v1005, 16
        %v1015 = vpop.permute.xlu0 %1014
        %v1018 = vsel %vm572, %v737, %v1013
        %v1019 = vsel %vm572, %v785, %v1015
        %v1020 = vpack.c.bf16 %v1019, %v1018
        %v1021 = vld [vmem:[%s408] sm:$0xf]
        %v1022 = vld [vmem:[%s408 + $0x4] sm:$0xf]
        %v1023 = vld [vmem:[%s408 + $0x8] sm:$0xf]
        %v1024 = vld [vmem:[%s408 + $0xc] sm:$0xf]
        %v1025 = vlaneseq
        %v1026 = vshrl.u32 %v1025, 7
        %v1027 = vsub.s32 1, %v1026
        %v1028 = vrot.slane %v476, %v1027
        %v1033 = vunpack.c.l.b16 %v1021
        %v1034 = vunpack.c.l.b16 %v1022
        %v1035 = vunpack.c.l.b16 %v1023
        %v1036 = vunpack.c.l.b16 %v1024
        %v1037 = vpack.c.b16 %v1034, %v1033
        %v1038 = vpack.c.b16 %v1036, %v1035
        %v1042 = vsel %vm512, %v1020, 0
        %1044 = vmatprep.subr.bf16.mxu0 0
        %1045 = vmatpush1.bf16.msra.mxu0 %v1037
        %1046 = vmatprep.subr.bf16.mxu0 0
        %1047 = vmatpush1.bf16.msra.mxu0 %v1038
        %1048 = vmatprep.subr.bf16.mxu0 0
        %1049 = vmatpush1.bf16.msra.mxu0 0
        %1050 = vmatprep.subr.bf16.mxu0 0
        %1051 = vmatpush1.bf16.msra.mxu0 0
        %1052 = vmatprep.subr.bf16.mxu0 0
        %1053 = vmatpush1.bf16.msra.mxu0 0
        %1054 = vmatprep.subr.bf16.mxu0 0
        %1055 = vmatpush1.bf16.msra.mxu0 0
        %1056 = vmatprep.subr.bf16.mxu0 0
        %1057 = vmatpush1.bf16.msra.mxu0 0
        %1058 = vmatprep.subr.bf16.mxu0 0
        %1059 = vmatpush1.bf16.msra.mxu0 0
        %1060 = vmatprep.subr.bf16.mxu0 0
        %1061 = vmatpush1.bf16.msra.mxu0 0
        %1062 = vmatprep.subr.bf16.mxu0 0
        %1063 = vmatpush1.bf16.msra.mxu0 0
        %1064 = vmatprep.subr.bf16.mxu0 0
        %1065 = vmatpush1.bf16.msra.mxu0 0
        %1066 = vmatprep.subr.bf16.mxu0 0
        %1067 = vmatpush1.bf16.msra.mxu0 0
        %1068 = vmatprep.subr.bf16.mxu0 0
        %1069 = vmatpush1.bf16.msra.mxu0 0
        %1070 = vmatprep.subr.bf16.mxu0 0
        %1071 = vmatpush1.bf16.msra.mxu0 0
        %1072 = vmatprep.subr.bf16.mxu0 0
        %1073 = vmatpush1.bf16.msra.mxu0 0
        %1074 = vmatprep.subr.bf16.mxu0 0
        %1075 = vmatpush1.bf16.msra.mxu0 0
        %1076 = vmatprep.mubr.bf16.mxu0 0
        %1077 = vmatmul.mubr.bf16.gmra.mrb[0].mxu0 %v1042
        %v1078 = vpop.f32.mrb[0].mxu0
        %v1079 = vadd.f32 %v1028, %v1078
        %v1080 = vpop.f32.mrb[0].mxu0
        %v1081 = vpop.f32.mrb[0].mxu0
        %v1082 = vadd.f32 %v1028, %v1081
        %v1083 = vpop.f32.mrb[0].mxu0
        %1084 = vdwg.mxu0
        %v1085 = vadd.f32 %v474, %v1079
        %v1086 = vadd.f32 %v475, %v1082
        %v1087 = vsel %vm512, %v1085, 0.0
        %1088 = vadd.xlane.f32.xlu0 %v1087
        %v1089 = vpop.xlane.xlu0 %1088
        %v1090 = vsel %vm512, %v1086, 0.0
        %1091 = vadd.xlane.f32.xlu0 %v1090
        %v1092 = vpop.xlane.xlu0 %1091
        %v1093 = vrcp.pop 32.0
        %v1094 = vmul.f32 %v1089, %v1093
        %v1095 = vmul.f32 %v1092, %v1093
        %v1096 = vsub.f32 %v1085, %v1094
        %v1097 = vsub.f32 %v1086, %v1095
        %v1098 = vmul.f32 %v1096, %v1096
        %v1099 = vmul.f32 %v1097, %v1097
        %v1100 = vsel %vm512, %v1098, 0.0
        %1101 = vadd.xlane.f32.xlu0 %v1100
        %v1102 = vpop.xlane.xlu0 %1101
        %v1103 = vsel %vm512, %v1099, 0.0
        %1104 = vadd.xlane.f32.xlu0 %v1103
        %v1105 = vpop.xlane.xlu0 %1104
        %v1106 = vmul.f32 %v1102, %v1093
        %v1107 = vmul.f32 %v1105, %v1093
        %v1108 = vadd.f32 %v1106, 1e-05
        %v1109 = vadd.f32 %v1107, 1e-05
        %v1110 = vrsqrt.pop %v1108
        %v1111 = vrsqrt.pop %v1109
        %v1112 = vmul.f32 %v1096, %v1110
        %v1113 = vmul.f32 %v1097, %v1111
        %v1114 = vlaneseq
        %v1115 = vshrl.u32 %v1114, 7
        %v1116 = vsub.s32 2, %v1115
        %v1117 = vrot.slane %v476, %v1116
        %v1118 = vmul.f32 %v1112, %v1117
        %v1119 = vmul.f32 %v1113, %v1117
        %v1120 = vlaneseq
        %v1121 = vshrl.u32 %v1120, 7
        %v1122 = vsub.s32 3, %v1121
        %v1123 = vrot.slane %v476, %v1122
        %v1124 = vadd.f32 %v1118, %v1123
        %v1125 = vadd.f32 %v1119, %v1123
        %v1126 = vpack.c.bf16 %v1125, %v1124
        %v1127 = vld [vmem:[%s413] sm:$0xf]
        %v1128 = vld [vmem:[%s413 + $0x4] sm:$0xf]
        %v1129 = vld [vmem:[%s413 + $0x8] sm:$0xf]
        %v1130 = vld [vmem:[%s413 + $0xc] sm:$0xf]
        %v1131 = vlaneseq
        %v1132 = vshrl.u32 %v1131, 7
        %v1133 = vsub.s32 4, %v1132
        %v1134 = vrot.slane %v476, %v1133
        %v1139 = vunpack.c.l.b16 %v1127
        %v1140 = vunpack.c.l.b16 %v1128
        %v1141 = vunpack.c.l.b16 %v1129
        %v1142 = vunpack.c.l.b16 %v1130
        %v1143 = vpack.c.b16 %v1140, %v1139
        %v1144 = vpack.c.b16 %v1142, %v1141
        %v1148 = vsel %vm512, %v1126, 0
        %1150 = vmatprep.subr.bf16.mxu0 0
        %1151 = vmatpush1.bf16.msra.mxu0 %v1143
        %1152 = vmatprep.subr.bf16.mxu0 0
        %1153 = vmatpush1.bf16.msra.mxu0 %v1144
        %1154 = vmatprep.subr.bf16.mxu0 0
        %1155 = vmatpush1.bf16.msra.mxu0 0
        %1156 = vmatprep.subr.bf16.mxu0 0
        %1157 = vmatpush1.bf16.msra.mxu0 0
        %1158 = vmatprep.subr.bf16.mxu0 0
        %1159 = vmatpush1.bf16.msra.mxu0 0
        %1160 = vmatprep.subr.bf16.mxu0 0
        %1161 = vmatpush1.bf16.msra.mxu0 0
        %1162 = vmatprep.subr.bf16.mxu0 0
        %1163 = vmatpush1.bf16.msra.mxu0 0
        %1164 = vmatprep.subr.bf16.mxu0 0
        %1165 = vmatpush1.bf16.msra.mxu0 0
        %1166 = vmatprep.subr.bf16.mxu0 0
        %1167 = vmatpush1.bf16.msra.mxu0 0
        %1168 = vmatprep.subr.bf16.mxu0 0
        %1169 = vmatpush1.bf16.msra.mxu0 0
        %1170 = vmatprep.subr.bf16.mxu0 0
        %1171 = vmatpush1.bf16.msra.mxu0 0
        %1172 = vmatprep.subr.bf16.mxu0 0
        %1173 = vmatpush1.bf16.msra.mxu0 0
        %1174 = vmatprep.subr.bf16.mxu0 0
        %1175 = vmatpush1.bf16.msra.mxu0 0
        %1176 = vmatprep.subr.bf16.mxu0 0
        %1177 = vmatpush1.bf16.msra.mxu0 0
        %1178 = vmatprep.subr.bf16.mxu0 0
        %1179 = vmatpush1.bf16.msra.mxu0 0
        %1180 = vmatprep.subr.bf16.mxu0 0
        %1181 = vmatpush1.bf16.msra.mxu0 0
        %1182 = vmatprep.mubr.bf16.mxu0 0
        %1183 = vmatmul.mubr.bf16.gmra.mrb[0].mxu0 %v1148
        %v1184 = vpop.f32.mrb[0].mxu0
        %v1185 = vadd.f32 %v1134, %v1184
        %v1186 = vpop.f32.mrb[0].mxu0
        %v1187 = vpop.f32.mrb[0].mxu0
        %v1188 = vadd.f32 %v1134, %v1187
        %v1189 = vpop.f32.mrb[0].mxu0
        %1190 = vdwg.mxu0
        %v1191 = vmul.f32 %v1185, 0.5
        %v1192 = vmul.f32 %v1188, 0.5
        %v1193 = vmul.f32 %v1185, 0.044715
        %v1194 = vmul.f32 %v1188, 0.044715
        %v1195 = vmul.f32 %v1193, %v1185
        %v1196 = vmul.f32 %v1194, %v1188
        %v1197 = vmul.f32 %v1195, %v1185
        %v1198 = vmul.f32 %v1196, %v1188
        %v1199 = vadd.f32 %v1185, %v1197
        %v1200 = vadd.f32 %v1188, %v1198
        %v1201 = vmul.f32 %v1199, 0.7978846
        %v1202 = vmul.f32 %v1200, 0.7978846
        %v1203 = vtanh.pop %v1201
        %v1204 = vtanh.pop %v1202
        %v1205 = vadd.f32 %v1203, 1.0
        %v1206 = vadd.f32 %v1204, 1.0
        %v1207 = vmul.f32 %v1191, %v1205
        %v1208 = vmul.f32 %v1192, %v1206
        %v1209 = vpack.c.bf16 %v1208, %v1207
        %v1210 = vld [vmem:[%s418] sm:$0xf]
        %v1211 = vld [vmem:[%s418 + $0x4] sm:$0xf]
        %v1212 = vld [vmem:[%s418 + $0x8] sm:$0xf]
        %v1213 = vld [vmem:[%s418 + $0xc] sm:$0xf]
        %v1214 = vld [vmem:[%s418 + $0x10] sm:$0xf]
        %v1215 = vld [vmem:[%s418 + $0x14] sm:$0xf]
        %v1216 = vld [vmem:[%s418 + $0x18] sm:$0xf]
        %v1217 = vld [vmem:[%s418 + $0x1c] sm:$0xf]
        %v1218 = vlaneseq
        %v1219 = vshrl.u32 %v1218, 7
        %v1220 = vsub.s32 5, %v1219
        %v1221 = vrot.slane %v476, %v1220
        %v1230 = vunpack.c.l.b16 %v1210
        %v1231 = vunpack.c.l.b16 %v1211
        %v1232 = vunpack.c.l.b16 %v1212
        %v1233 = vunpack.c.l.b16 %v1213
        %v1234 = vunpack.c.l.b16 %v1214
        %v1235 = vunpack.c.l.b16 %v1215
        %v1236 = vunpack.c.l.b16 %v1216
        %v1237 = vunpack.c.l.b16 %v1217
        %v1238 = vpack.c.b16 %v1231, %v1230
        %v1239 = vpack.c.b16 %v1233, %v1232
        %v1240 = vpack.c.b16 %v1235, %v1234
        %v1241 = vpack.c.b16 %v1237, %v1236
        %vm1246 = vcmask 523264
        %v1248 = vsel %vm1246, %v1209, 0
        %1250 = vmatprep.subr.bf16.mxu0 0
        %1251 = vmatpush1.bf16.msra.mxu0 %v1238
        %1252 = vmatprep.subr.bf16.mxu0 0
        %1253 = vmatpush1.bf16.msra.mxu0 %v1239
        %1254 = vmatprep.subr.bf16.mxu0 0
        %1255 = vmatpush1.bf16.msra.mxu0 %v1240
        %1256 = vmatprep.subr.bf16.mxu0 0
        %1257 = vmatpush1.bf16.msra.mxu0 %v1241
        %1258 = vmatprep.subr.bf16.mxu0 0
        %1259 = vmatpush1.bf16.msra.mxu0 0
        %1260 = vmatprep.subr.bf16.mxu0 0
        %1261 = vmatpush1.bf16.msra.mxu0 0
        %1262 = vmatprep.subr.bf16.mxu0 0
        %1263 = vmatpush1.bf16.msra.mxu0 0
        %1264 = vmatprep.subr.bf16.mxu0 0
        %1265 = vmatpush1.bf16.msra.mxu0 0
        %1266 = vmatprep.subr.bf16.mxu0 0
        %1267 = vmatpush1.bf16.msra.mxu0 0
        %1268 = vmatprep.subr.bf16.mxu0 0
        %1269 = vmatpush1.bf16.msra.mxu0 0
        %1270 = vmatprep.subr.bf16.mxu0 0
        %1271 = vmatpush1.bf16.msra.mxu0 0
        %1272 = vmatprep.subr.bf16.mxu0 0
        %1273 = vmatpush1.bf16.msra.mxu0 0
        %1274 = vmatprep.subr.bf16.mxu0 0
        %1275 = vmatpush1.bf16.msra.mxu0 0
        %1276 = vmatprep.subr.bf16.mxu0 0
        %1277 = vmatpush1.bf16.msra.mxu0 0
        %1278 = vmatprep.subr.bf16.mxu0 0
        %1279 = vmatpush1.bf16.msra.mxu0 0
        %1280 = vmatprep.subr.bf16.mxu0 0
        %1281 = vmatpush1.bf16.msra.mxu0 0
        %1282 = vmatprep.mubr.bf16.mxu0 0
        %1283 = vmatmul.mubr.bf16.gmra.mrb[0].mxu0 %v1248
        %v1284 = vpop.f32.mrb[0].mxu0
        %v1285 = vadd.f32 %v1221, %v1284
        %v1286 = vpop.f32.mrb[0].mxu0
        %v1287 = vpop.f32.mrb[0].mxu0
        %v1288 = vadd.f32 %v1221, %v1287
        %v1289 = vpop.f32.mrb[0].mxu0
        %1290 = vdwg.mxu0
        %v1291 = vadd.f32 %v1124, %v1285
        %v1292 = vadd.f32 %v1125, %v1288
        %v1293 = vsel %vm512, %v1291, 0.0
        %1294 = vadd.xlane.f32.xlu0 %v1293
        %v1295 = vpop.xlane.xlu0 %1294
        %v1296 = vsel %vm512, %v1292, 0.0
        %1297 = vadd.xlane.f32.xlu0 %v1296
        %v1298 = vpop.xlane.xlu0 %1297
        %v1299 = vmul.f32 %v1295, %v1093
        %v1300 = vmul.f32 %v1298, %v1093
        %v1301 = vsub.f32 %v1291, %v1299
        %v1302 = vsub.f32 %v1292, %v1300
        %v1303 = vmul.f32 %v1301, %v1301
        %v1304 = vmul.f32 %v1302, %v1302
        %v1305 = vsel %vm512, %v1303, 0.0
        %1306 = vadd.xlane.f32.xlu0 %v1305
        %v1307 = vpop.xlane.xlu0 %1306
        %v1308 = vsel %vm512, %v1304, 0.0
        %1309 = vadd.xlane.f32.xlu0 %v1308
        %v1310 = vpop.xlane.xlu0 %1309
        %v1311 = vmul.f32 %v1307, %v1093
        %v1312 = vmul.f32 %v1310, %v1093
        %v1313 = vadd.f32 %v1311, 1e-05
        %v1314 = vadd.f32 %v1312, 1e-05
        %v1315 = vrsqrt.pop %v1313
        %v1316 = vrsqrt.pop %v1314
        %v1317 = vmul.f32 %v1301, %v1315
        %v1318 = vmul.f32 %v1302, %v1316
        %v1319 = vlaneseq
        %v1320 = vshrl.u32 %v1319, 7
        %v1321 = vsub.s32 6, %v1320
        %v1322 = vrot.slane %v476, %v1321
        %v1323 = vmul.f32 %v1317, %v1322
        %v1324 = vmul.f32 %v1318, %v1322
        %v1325 = vlaneseq
        %v1326 = vshrl.u32 %v1325, 7
        %v1327 = vsub.s32 7, %v1326
        %v1328 = vrot.slane %v476, %v1327
        %v1329 = vadd.f32 %v1323, %v1328
        %v1330 = vadd.f32 %v1324, %v1328
        %1331 = vst.msk [vmem:[#allocation2] sm:$0xff] %vm512, %v1329
        %1332 = vst.msk [vmem:[#allocation2 + $0x8] sm:$0xff] %vm512, %v1330
        %p1333 = scmp.eq.s32.totalorder %s22, 1
        // Predicated region
        $region65: #{roberta_pooled.1} parent=59 // pred_check
          %p1334 = pneg %p1333
        $region66: #{roberta_pooled.1} parent=59 // pred_check_branch
          %1336 = sbr.rel (%p1334) target = $region68
        $region67: #{roberta_pooled.1} parent=59 // pred_region
          %v1337 = vpack.c.bf16 %v1329, %v1329
          %v1338 = vpack.c.bf16 %v1330, %v1330
          %v1339 = vld [vmem:[%s8] sm:$0xf]
          %v1340 = vld [vmem:[%s8 + $0x4] sm:$0xf]
          %v1341 = vld [vmem:[%s8 + $0x8] sm:$0xf]
          %v1342 = vld [vmem:[%s8 + $0xc] sm:$0xf]
          %v1343 = vld [vmem:[%s9] sm:$0x1]
          %v1345 = vlaneseq
          %v1346 = vshrl.u32 %v1345, 7
          %v1347 = vsub.s32 0, %v1346
          %v1348 = vrot.slane %v1343, %v1347
          %v1352 = vunpack.c.l.b16 %v1337
          %v1353 = vunpack.c.l.b16 %v1338
          %v1354 = vrot.slane %v1353, 7
          %vm1355 = vcmask 1041409
          %v1356 = vsel %vm1355, %v1354, %v1352
          %v1357 = vpack.c.b16 %v1356, %v1356
          %v1362 = vunpack.c.l.b16 %v1339
          %v1363 = vunpack.c.l.b16 %v1340
          %v1364 = vunpack.c.l.b16 %v1341
          %v1365 = vunpack.c.l.b16 %v1342
          %v1366 = vpack.c.b16 %v1363, %v1362
          %v1367 = vpack.c.b16 %v1365, %v1364
          %v1371 = vsel %vm512, %v1357, 0
          %1373 = vmatprep.subr.bf16.mxu0 0
          %1374 = vmatpush1.bf16.msra.mxu0 %v1366
          %1375 = vmatprep.subr.bf16.mxu0 0
          %1376 = vmatpush1.bf16.msra.mxu0 %v1367
          %1377 = vmatprep.subr.bf16.mxu0 0
          %1378 = vmatpush1.bf16.msra.mxu0 0
          %1379 = vmatprep.subr.bf16.mxu0 0
          %1380 = vmatpush1.bf16.msra.mxu0 0
          %1381 = vmatprep.subr.bf16.mxu0 0
          %1382 = vmatpush1.bf16.msra.mxu0 0
          %1383 = vmatprep.subr.bf16.mxu0 0
          %1384 = vmatpush1.bf16.msra.mxu0 0
          %1385 = vmatprep.subr.bf16.mxu0 0
          %1386 = vmatpush1.bf16.msra.mxu0 0
          %1387 = vmatprep.subr.bf16.mxu0 0
          %1388 = vmatpush1.bf16.msra.mxu0 0
          %1389 = vmatprep.subr.bf16.mxu0 0
          %1390 = vmatpush1.bf16.msra.mxu0 0
          %1391 = vmatprep.subr.bf16.mxu0 0
          %1392 = vmatpush1.bf16.msra.mxu0 0
          %1393 = vmatprep.subr.bf16.mxu0 0
          %1394 = vmatpush1.bf16.msra.mxu0 0
          %1395 = vmatprep.subr.bf16.mxu0 0
          %1396 = vmatpush1.bf16.msra.mxu0 0
          %1397 = vmatprep.subr.bf16.mxu0 0
          %1398 = vmatpush1.bf16.msra.mxu0 0
          %1399 = vmatprep.subr.bf16.mxu0 0
          %1400 = vmatpush1.bf16.msra.mxu0 0
          %1401 = vmatprep.subr.bf16.mxu0 0
          %1402 = vmatpush1.bf16.msra.mxu0 0
          %1403 = vmatprep.subr.bf16.mxu0 0
          %1404 = vmatpush1.bf16.msra.mxu0 0
          %1405 = vmatprep.mubr.bf16.mxu0 0
          %1406 = vmatmul.mubr.bf16.gmra.mrb[0].mxu0 %v1371
          %v1407 = vpop.f32.mrb[0].mxu0
          %v1408 = vadd.f32 %v1348, %v1407
          %v1409 = vpop.f32.mrb[0].mxu0
          %v1410 = vpop.f32.mrb[0].mxu0
          %v1411 = vpop.f32.mrb[0].mxu0
          %1412 = vdwg.mxu0
          %v1413 = vtanh.pop %v1408
          %vm1414 = vcmask 254976
          %1415 = vst.msk [vmem:[#allocation3] sm:$0x3] %vm1414, %v1413
        $region68: #{roberta_pooled.1} parent=59 // pred_fallthru
          _
        // Predicated region
        $region69: #{roberta_pooled.1} parent=59 // pred_check
          %p1416 = pneg %p270
        $region70: #{roberta_pooled.1} parent=59 // pred_check_branch
          %1418 = sbr.rel (%p1416) target = $region72
        $region71: #{roberta_pooled.1} parent=59 // pred_region
          %s1420 = ssub.s32 32, 32
          %1421 = vsyncadd [#allocation4], %s1420
          %s1423 = sshll.u32 [#allocation3], 4
          %s1424 = int_to_ptr.vmem [resolvable:$true] %s1423
          %1426 = dma.vmem_to_hbm [thread:$0]  %s1424, 32, %s10, [#allocation4]
        $region72: #{roberta_pooled.1} parent=59 // pred_fallthru
          _
        // Predicated region
        $region73: #{roberta_pooled.1} parent=59 // pred_check
          %p1427 = pneg %p270
        $region74: #{roberta_pooled.1} parent=59 // pred_check_branch
          %1429 = sbr.rel (%p1427) target = $region76
        $region75: #{roberta_pooled.1} parent=59 // pred_region
          %1430 = dma.done [#allocation4], 32
        $region76: #{roberta_pooled.1} parent=59 // pred_fallthru
          _
      $region60: #{roberta_pooled.1} parent=5 // pred_fallthru
        _
      %p1431 = scmp.le.s32.totalorder 2, %s17
      // Predicated region
      $region77: #{roberta_pooled.1} parent=5 // pred_check
        %p1432 = pneg %p1431
      $region78: #{roberta_pooled.1} parent=5 // pred_check_branch
        %1434 = sbr.rel (%p1432) target = $region80
      $region79: #{roberta_pooled.1} parent=5 // pred_region
        %s1435 = ssub.s32 %s17, 2
      $region80: #{roberta_pooled.1} parent=5 // pred_fallthru
        _
    $region6: #{roberta_pooled.1} parent=1 // loop_footer
      %s21 = sadd.s32 1, %s17
    $region7: #{roberta_pooled.1} parent=1 // loop_footer_branch
      %16 = sbr.rel target = $region3
    $region8: #{roberta_pooled.1} parent=1 // loop_exit
      _
    %1436 = vsyncpa [#allocation4], 1
    %s1437 = scalar_lea.sflag [#allocation4], 1
    %1438 = vsyncpa %s1437, 1

</llo_original>
